<compile_context>
chip_gen: v7x
topology: tpu7x:2x2x1
jax: 0.10.0
libtpu: 0.0.40
codegen_flags: <defaults>
</compile_context>

<pallas_src>
import functools

import jax
import jax.numpy as jnp
from jax.experimental import pallas as pl
from jax.experimental.pallas import tpu as pltpu


_VMEM_LIMIT_BYTES = 48 * 1024 * 1024   # <= v7x physical 64 MiB; ample on v5e/v6e
_RESIDENT_H_MAX_NODES = 16 * 1024      # keep full h VMEM-resident up to this N
_HIDDEN = 128                          # module default hidden_channels


def _round_up(x, m):
    return ((x + m - 1) // m) * m


def _choose_tiles(n, tm_max, tk_max):
    """Pick (n_pad, tm, tk) with tm | n_pad and tk | n_pad, minimal padding."""
    n_pad = _round_up(max(n, 1), 128)
    if n_pad <= tm_max:
        # Small/medium graph: single tile along both grid axes (A tile <= 2 MiB).
        return n_pad, n_pad, n_pad
    n_pad = _round_up(n_pad, tm_max)
    return n_pad, tm_max, tk_max        # tk_max | tm_max | n_pad


# -----------------------------------------------------------------------------
# Layer kernel:  h' = act( A_hat @ (h @ W_l) + (e_l + b_l) )
# grid = (row tiles [parallel], contraction tiles [arbitrary]); f32 VMEM acc.
# The feature transform is fused into the k-loop; h is VMEM-resident when small.
# -----------------------------------------------------------------------------
def _make_layer_kernel(relu, h_resident, tk):
    def kernel(a_ref, h_ref, w_ref, eb_ref, out_ref, acc_ref):
        k = pl.program_id(1)

        @pl.when(k == 0)
        def _():
            acc_ref[...] = jnp.zeros_like(acc_ref)

        if h_resident:
            off = pl.multiple_of(k * tk, tk)
            h_blk = h_ref[pl.ds(off, tk), :]          # slice of resident h
        else:
            h_blk = h_ref[...]                        # streamed (tk, H) tile

        # Fused per-layer feature transform (MXU has huge slack: mem-bound).
        t_blk = jnp.dot(h_blk, w_ref[...],
                        preferred_element_type=jnp.float32).astype(jnp.bfloat16)
        acc_ref[...] += jnp.dot(a_ref[...], t_blk,
                                preferred_element_type=jnp.float32)

        @pl.when(k == pl.num_programs(1) - 1)
        def _():
            v = acc_ref[...] + eb_ref[...]            # bias pre-folded into eb
            if relu:
                v = jnp.maximum(v, 0.0)               # ReLU between layers only
            # dropout(p=drop_ratio, training=False) -> identity
            out_ref[...] = v.astype(out_ref.dtype)
    return kernel


def _gcn_layer(a, h, w, eb, *, relu, tm, tk, h_resident):
    n_pad, hdim = h.shape
    grid = (n_pad // tm, n_pad // tk)

    if h_resident:
        # Fetched once, stays VMEM-resident across the whole grid.
        h_spec = pl.BlockSpec((n_pad, hdim), lambda i, k: (0, 0))
        h_stream_factor = 1
    else:
        # Fallback for very large graphs: re-streamed once per row tile.
        h_spec = pl.BlockSpec((tk, hdim), lambda i, k: (k, 0))
        h_stream_factor = grid[0]

    flops = 2 * n_pad * n_pad * hdim + 2 * grid[0] * n_pad * hdim * hdim
    bytes_accessed = (2 * n_pad * n_pad                       # A (bf16)
                      + 2 * h_stream_factor * n_pad * hdim    # h (bf16)
                      + 2 * hdim * hdim                       # W (bf16)
                      + 4 * n_pad * hdim                      # eb (f32)
                      + 2 * n_pad * hdim)                     # out (bf16)

    return pl.pallas_call(
        _make_layer_kernel(relu, h_resident, tk),
        out_shape=jax.ShapeDtypeStruct((n_pad, hdim), jnp.bfloat16),
        grid_spec=pltpu.PrefetchScalarGridSpec(
            num_scalar_prefetch=0,
            grid=grid,
            in_specs=[
                pl.BlockSpec((tm, tk), lambda i, k: (i, k)),      # A tile (streamed)
                h_spec,                                           # h (resident/stream)
                pl.BlockSpec((hdim, hdim), lambda i, k: (0, 0)),  # W_l (resident)
                pl.BlockSpec((tm, hdim), lambda i, k: (i, 0)),    # e_l + b_l tile
            ],
            out_specs=pl.BlockSpec((tm, hdim), lambda i, k: (i, 0)),
            scratch_shapes=[pltpu.VMEM((tm, hdim), jnp.float32)]),
        compiler_params=pltpu.CompilerParams(
            dimension_semantics=("parallel", "arbitrary"),
            vmem_limit_bytes=_VMEM_LIMIT_BYTES),
        cost_estimate=pl.CostEstimate(
            flops=flops, transcendentals=0, bytes_accessed=bytes_accessed),
    )(a, h, w, eb)


# -----------------------------------------------------------------------------
# Pool + head kernel: logits = (P @ h_final) @ W_lin + b_lin  (classes padded
# to 128 lanes for unmasked stores).  grid over node-contraction tiles.
# -----------------------------------------------------------------------------
def _pool_head_kernel(p_ref, h_ref, wlin_ref, blin_ref, out_ref, acc_ref):
    @pl.when(pl.program_id(0) == 0)
    def _():
        acc_ref[...] = jnp.zeros_like(acc_ref)

    acc_ref[...] += jnp.dot(p_ref[...], h_ref[...],
                            preferred_element_type=jnp.float32)

    @pl.when(pl.program_id(0) == pl.num_programs(0) - 1)
    def _():
        # F.dropout(training=False) -> identity; linear head, lane-dense output.
        logits = jnp.dot(acc_ref[...].astype(wlin_ref.dtype), wlin_ref[...],
                         preferred_element_type=jnp.float32)
        out_ref[...] = logits + blin_ref[...]


def _pool_head(p, h, w_lin, b_lin, *, tk):
    num_graphs, n_pad = p.shape
    hdim = h.shape[1]
    c_pad = w_lin.shape[1]
    return pl.pallas_call(
        _pool_head_kernel,
        out_shape=jax.ShapeDtypeStruct((num_graphs, c_pad), jnp.float32),
        grid_spec=pltpu.PrefetchScalarGridSpec(
            num_scalar_prefetch=0,
            grid=(n_pad // tk,),
            in_specs=[
                pl.BlockSpec((num_graphs, tk), lambda k: (0, k)),  # pool tile
                pl.BlockSpec((tk, hdim), lambda k: (k, 0)),        # h tile
                pl.BlockSpec((hdim, c_pad), lambda k: (0, 0)),     # resident head W
                pl.BlockSpec((1, c_pad), lambda k: (0, 0)),        # resident head b
            ],
            out_specs=pl.BlockSpec((num_graphs, c_pad), lambda k: (0, 0)),
            scratch_shapes=[pltpu.VMEM((num_graphs, hdim), jnp.float32)]),
        compiler_params=pltpu.CompilerParams(
            dimension_semantics=("arbitrary",),
            vmem_limit_bytes=_VMEM_LIMIT_BYTES),
        cost_estimate=pl.CostEstimate(
            flops=2 * num_graphs * n_pad * hdim + 2 * num_graphs * hdim * c_pad,
            transcendentals=0,
            bytes_accessed=(2 * num_graphs * n_pad + 2 * n_pad * hdim
                            + 2 * hdim * c_pad + 4 * num_graphs * c_pad)),
    )(p, h, w_lin, b_lin)


# -----------------------------------------------------------------------------
# Full forward: L fused GCN layers -> sum pool + linear head.
# -----------------------------------------------------------------------------
def _pad_to(arr, size, axis):
    pad = size - arr.shape[axis]
    if pad <= 0:
        return arr
    widths = [(0, 0)] * arr.ndim
    widths[axis] = (0, pad)
    return jnp.pad(arr, widths)


@functools.partial(jax.jit, static_argnames=("tm_max", "tk_max"))
def gcn_forward(x, a_hat, pool_mat, w_stack, b_stack, e_stack, w_lin, b_lin,
                *, tm_max=1024, tk_max=512):
    assert tm_max % tk_max == 0, "tk_max must divide tm_max"
    n, _ = x.shape
    num_layers = w_stack.shape[0]
    num_classes = w_lin.shape[1]

    n_pad, tm, tk = _choose_tiles(n, tm_max, tk_max)
    c_pad = _round_up(num_classes, 128)
    h_resident = n_pad <= _RESIDENT_H_MAX_NODES

    # Fold per-layer bias into the edge-feature term (one fewer kernel operand).
    eb_stack = e_stack + b_stack                      # [L, N, H]

    # Zero-padding is exact: padded A rows/cols, eb rows and pool columns are
    # all zero, so padded nodes never contribute to real outputs.
    x_p = _pad_to(x, n_pad, 0).astype(jnp.bfloat16)
    a_p = _pad_to(_pad_to(a_hat, n_pad, 0), n_pad, 1).astype(jnp.bfloat16)
    p_p = _pad_to(pool_mat, n_pad, 1).astype(jnp.bfloat16)
    eb_p = _pad_to(eb_stack, n_pad, 1).astype(jnp.float32)
    w_bf = w_stack.astype(jnp.bfloat16)
    wlin_p = _pad_to(w_lin, c_pad, 1).astype(jnp.bfloat16)
    blin_p = _pad_to(b_lin, c_pad, 1).astype(jnp.float32)

    h = x_p
    for l in range(num_layers):
        h = _gcn_layer(a_p, h, w_bf[l], eb_p[l],
                       relu=(l < num_layers - 1),
                       tm=tm, tk=tk, h_resident=h_resident)

    # Pool-head contraction tile: decoupled from the layer tk, large & divisor
    # of n_pad (n_pad is a multiple of 1024 whenever it exceeds 2048).
    if n_pad <= 2048:
        tk_pool = n_pad
    else:
        tk_pool = 2048 if n_pad % 2048 == 0 else 1024

    out_pad = _pool_head(p_p, h, wlin_p, blin_p, tk=tk_pool)
    return out_pad[:, :num_classes]


# -----------------------------------------------------------------------------
# Pure-JAX f32 reference (for correctness check).
# -----------------------------------------------------------------------------
def gcn_reference(x, a_hat, pool_mat, w_stack, b_stack, e_stack, w_lin, b_lin):
    h = x
    num_layers = w_stack.shape[0]
    for l in range(num_layers):
        h = a_hat @ (h @ w_stack[l]) + b_stack[l] + e_stack[l]
        if l < num_layers - 1:
            h = jnp.maximum(h, 0.0)
    pooled = pool_mat @ h
    return pooled @ w_lin + b_lin


# -----------------------------------------------------------------------------
# Glue (plain JAX): graph preprocessing -> dense operands for the kernels.
# -----------------------------------------------------------------------------
def build_dense_graph(edge_index, edge_attr, batch, num_nodes, num_graphs,
                      w_edge_stack):
    """Dense normalized adjacency, per-layer edge-feature terms, pool matrix."""
    src, dst = edge_index[0], edge_index[1]

    # A + I (dense), symmetric GCN normalization.
    # TODO(synk): symmetrize / dedupe edges if the reference GCNEdge does.
    adj = jnp.zeros((num_nodes, num_nodes), jnp.float32)
    adj = adj.at[src, dst].add(1.0)
    adj = adj + jnp.eye(num_nodes, dtype=jnp.float32)
    deg = adj.sum(axis=1)
    d_inv_sqrt = jnp.where(deg > 0, 1.0 / jnp.sqrt(deg), 0.0)
    a_hat = d_inv_sqrt[:, None] * adj * d_inv_sqrt[None, :]

    # Per-layer edge-feature contribution, aggregated to destination nodes with
    # the same normalization (scatter-add glue; all matmuls stay in-kernel).
    norm = d_inv_sqrt[src] * d_inv_sqrt[dst]                        # [E]
    num_layers = w_edge_stack.shape[0]
    e_terms = []
    for l in range(num_layers):
        edge_emb = edge_attr @ w_edge_stack[l]                      # [E, H]
        msg = norm[:, None] * edge_emb
        e_terms.append(
            jnp.zeros((num_nodes, edge_emb.shape[1]), jnp.float32).at[dst].add(msg)
        )
    e_stack = jnp.stack(e_terms, axis=0)                            # [L, N, H]

    # Sum-pooling membership matrix: P[g, n] = 1 iff batch[n] == g.
    pool_mat = (batch[None, :] == jnp.arange(num_graphs)[:, None]).astype(jnp.float32)
    return a_hat, e_stack, pool_mat


def init_params(key, hidden, num_layers, num_classes, edge_dim):
    ks = jax.random.split(key, 4)
    w_stack = 0.1 * jax.random.normal(ks[0], (num_layers, hidden, hidden), jnp.float32)
    b_stack = 0.1 * jax.random.normal(ks[1], (num_layers, 1, hidden), jnp.float32)
    w_edge = 0.1 * jax.random.normal(ks[2], (num_layers, edge_dim, hidden), jnp.float32)
    kl1, kl2 = jax.random.split(ks[3])
    w_lin = 0.1 * jax.random.normal(kl1, (hidden, num_classes), jnp.float32)
    b_lin = 0.1 * jax.random.normal(kl2, (1, num_classes), jnp.float32)
    return w_stack, b_stack, w_edge, w_lin, b_lin


if __name__ == "__main__":
    # Small but representative problem (N pads to 256 -> single-tile grids):
    #   x: [N, hidden], edge_index: [2, E], edge_attr: [E, edge_dim], batch: [N]
    N, E = 200, 600
    hidden, num_layers, num_classes = _HIDDEN, 3, 2   # module defaults: 128 / 3 / 2
    edge_dim = 8
    num_graphs = 4

    key = jax.random.PRNGKey(0)
    kx, ke, ks, kd, kp = jax.random.split(key, 5)

    x = jax.random.normal(kx, (N, hidden), jnp.float32)
    edge_attr = jax.random.normal(ke, (E, edge_dim), jnp.float32)
    src = jax.random.randint(ks, (E,), 0, N, dtype=jnp.int32)
    dst = jax.random.randint(kd, (E,), 0, N, dtype=jnp.int32)
    edge_index = jnp.stack([src, dst], axis=0)
    batch = jnp.repeat(jnp.arange(num_graphs, dtype=jnp.int32), N // num_graphs)

    w_stack, b_stack, w_edge, w_lin, b_lin = init_params(
        kp, hidden, num_layers, num_classes, edge_dim)

    a_hat, e_stack, pool_mat = build_dense_graph(
        edge_index, edge_attr, batch, N, num_graphs, w_edge)

    logits = gcn_forward(x, a_hat, pool_mat, w_stack, b_stack, e_stack,
                         w_lin, b_lin)
    logits = jax.block_until_ready(logits)

    ref = gcn_reference(x, a_hat, pool_mat, w_stack, b_stack, e_stack,
                        w_lin, b_lin)
    rel_err = float(jnp.max(jnp.abs(logits - ref)) / (jnp.max(jnp.abs(ref)) + 1e-6))

    assert logits.shape == (num_graphs, num_classes)
    assert bool(jnp.all(jnp.isfinite(logits)))
    assert rel_err < 0.1, f"mismatch vs f32 reference: rel_err={rel_err}"
    print("KERNEL_OK")
</pallas_src>

<mosaic_0001>
module attributes {stable_mosaic.version = 11 : i64} {
  func.func @kernel(%arg0: i32, %arg1: i32, %arg2: memref<256x256xbf16, #tpu.memory_space<vmem>>, %arg3: memref<256x128xbf16, #tpu.memory_space<vmem>>, %arg4: memref<128x128xbf16, #tpu.memory_space<vmem>>, %arg5: memref<256x128xf32, #tpu.memory_space<vmem>>, %arg6: memref<256x128xbf16, #tpu.memory_space<vmem>>, %arg7: memref<256x128xf32, #tpu.memory_space<vmem>>) attributes {dimension_semantics = [#tpu.dimension_semantics<parallel>, #tpu.dimension_semantics<arbitrary>], iteration_bounds = array<i64: 1, 1>, scalar_prefetch = 0 : i64, scratch_operands = 1 : i64, tpu.core_type = #tpu.core_type<tc>, window_params = [{transform_indices = @transform_0, window_bounds = array<i64: 256, 256>}, {pipeline_mode = #tpu.pipeline_mode<synchronous>, transform_indices = @transform_1, window_bounds = array<i64: 256, 128>}, {pipeline_mode = #tpu.pipeline_mode<synchronous>, transform_indices = @transform_2, window_bounds = array<i64: 128, 128>}, {transform_indices = @transform_3, window_bounds = array<i64: 256, 128>}, {transform_indices = @transform_4, window_bounds = array<i64: 256, 128>}]} {
    %c0_i32 = arith.constant 0 : i32
    %0 = arith.cmpi eq, %arg1, %c0_i32 : i32
    %1 = arith.extui %0 : i1 to i32
    %c0_i32_0 = arith.constant 0 : i32
    %2 = arith.cmpi ne, %1, %c0_i32_0 : i32
    scf.if %2 {
      %cst_12 = arith.constant 0.000000e+00 : f32
      %18 = vector.broadcast %cst_12 : f32 to vector<256x128xf32>
      %c0_13 = arith.constant 0 : index
      %c0_14 = arith.constant 0 : index
      %19 = vector.load %arg7[%c0_13, %c0_14] : memref<256x128xf32, #tpu.memory_space<vmem>>, vector<256x128xf32>
      tpu.vector_store %arg7[%c0_13, %c0_14], %18 {strides = array<i32>} : memref<256x128xf32, #tpu.memory_space<vmem>>, vector<256x128xf32>,
    } else {
    }
    %c256_i32 = arith.constant 256 : i32
    %3 = arith.muli %arg1, %c256_i32 : i32
    %4 = tpu.assume_multiple %3, 256 : i32
    %5 = arith.index_cast %4 : i32 to index
    %c0 = arith.constant 0 : index
    %6 = vector.load %arg3[%5, %c0] : memref<256x128xbf16, #tpu.memory_space<vmem>>, vector<256x128xbf16>
    %c0_1 = arith.constant 0 : index
    %c0_2 = arith.constant 0 : index
    %7 = vector.load %arg4[%c0_1, %c0_2] : memref<128x128xbf16, #tpu.memory_space<vmem>>, vector<128x128xbf16>
    %cst = arith.constant dense<0.000000e+00> : vector<256x128xf32>
    %8 = tpu.matmul %6, %7, %cst {dimension_numbers = #tpu.dot_dimension_numbers<[1], [0], [0], [1], [0, 0, 1, 1], [], []>} : vector<256x128xbf16>, vector<128x128xbf16>, vector<256x128xf32> -> vector<256x128xf32>
    %9 = arith.truncf %8 : vector<256x128xf32> to vector<256x128xbf16>
    %c0_3 = arith.constant 0 : index
    %c0_4 = arith.constant 0 : index
    %10 = vector.load %arg7[%c0_3, %c0_4] : memref<256x128xf32, #tpu.memory_space<vmem>>, vector<256x128xf32>
    %c0_5 = arith.constant 0 : index
    %c0_6 = arith.constant 0 : index
    %11 = vector.load %arg2[%c0_5, %c0_6] : memref<256x256xbf16, #tpu.memory_space<vmem>>, vector<256x256xbf16>
    %cst_7 = arith.constant dense<0.000000e+00> : vector<256x128xf32>
    %12 = tpu.matmul %11, %9, %cst_7 {dimension_numbers = #tpu.dot_dimension_numbers<[1], [0], [0], [1], [0, 0, 1, 1], [], []>} : vector<256x256xbf16>, vector<256x128xbf16>, vector<256x128xf32> -> vector<256x128xf32>
    %13 = arith.addf %10, %12 : vector<256x128xf32>
    %c0_8 = arith.constant 0 : index
    %c0_9 = arith.constant 0 : index
    %14 = vector.load %arg7[%c0_8, %c0_9] : memref<256x128xf32, #tpu.memory_space<vmem>>, vector<256x128xf32>
    tpu.vector_store %arg7[%c0_8, %c0_9], %13 {strides = array<i32>} : memref<256x128xf32, #tpu.memory_space<vmem>>, vector<256x128xf32>,
    %c0_i32_10 = arith.constant 0 : i32
    %15 = arith.cmpi eq, %arg1, %c0_i32_10 : i32
    %16 = arith.extui %15 : i1 to i32
    %c0_i32_11 = arith.constant 0 : i32
    %17 = arith.cmpi ne, %16, %c0_i32_11 : i32
    scf.if %17 {
      %c0_12 = arith.constant 0 : index
      %c0_13 = arith.constant 0 : index
      %18 = vector.load %arg7[%c0_12, %c0_13] : memref<256x128xf32, #tpu.memory_space<vmem>>, vector<256x128xf32>
      %c0_14 = arith.constant 0 : index
      %c0_15 = arith.constant 0 : index
      %19 = vector.load %arg5[%c0_14, %c0_15] : memref<256x128xf32, #tpu.memory_space<vmem>>, vector<256x128xf32>
      %20 = arith.addf %18, %19 : vector<256x128xf32>
      %21 = arith.truncf %20 : vector<256x128xf32> to vector<256x128xbf16>
      %c0_16 = arith.constant 0 : index
      %c0_17 = arith.constant 0 : index
      %22 = vector.load %arg6[%c0_16, %c0_17] : memref<256x128xbf16, #tpu.memory_space<vmem>>, vector<256x128xbf16>
      tpu.vector_store %arg6[%c0_16, %c0_17], %21 {strides = array<i32>} : memref<256x128xbf16, #tpu.memory_space<vmem>>, vector<256x128xbf16>,
    } else {
    }
    return
  }
  func.func @transform_0(%arg0: i32, %arg1: i32) -> (i32, i32) {
    %c0_i32 = arith.constant 0 : i32
    return %arg0, %arg1 : i32, i32
  }
  func.func @transform_1(%arg0: i32, %arg1: i32) -> (i32, i32) {
    %c0_i32 = arith.constant 0 : i32
    %c0_i32_0 = arith.constant 0 : i32
    %c0_i32_1 = arith.constant 0 : i32
    return %c0_i32, %c0_i32_0 : i32, i32
  }
  func.func @transform_2(%arg0: i32, %arg1: i32) -> (i32, i32) {
    %c0_i32 = arith.constant 0 : i32
    %c0_i32_0 = arith.constant 0 : i32
    %c0_i32_1 = arith.constant 0 : i32
    return %c0_i32, %c0_i32_0 : i32, i32
  }
  func.func @transform_3(%arg0: i32, %arg1: i32) -> (i32, i32) {
    %c0_i32 = arith.constant 0 : i32
    %c0_i32_0 = arith.constant 0 : i32
    return %arg0, %c0_i32 : i32, i32
  }
  func.func @transform_4(%arg0: i32, %arg1: i32) -> (i32, i32) {
    %c0_i32 = arith.constant 0 : i32
    %c0_i32_0 = arith.constant 0 : i32
    return %arg0, %c0_i32 : i32, i32
  }
}

module attributes {stable_mosaic.version = 11 : i64} {
  func.func @kernel(%arg0: i32, %arg1: i32, %arg2: memref<256x256xbf16, #tpu.memory_space<vmem>>, %arg3: memref<256x128xbf16, #tpu.memory_space<vmem>>, %arg4: memref<128x128xbf16, #tpu.memory_space<vmem>>, %arg5: memref<256x128xf32, #tpu.memory_space<vmem>>, %arg6: memref<256x128xbf16, #tpu.memory_space<vmem>>, %arg7: memref<256x128xf32, #tpu.memory_space<vmem>>) attributes {dimension_semantics = [#tpu.dimension_semantics<parallel>, #tpu.dimension_semantics<arbitrary>], iteration_bounds = array<i64: 1, 1>, scalar_prefetch = 0 : i64, scratch_operands = 1 : i64, tpu.core_type = #tpu.core_type<tc>, window_params = [{transform_indices = @transform_0, window_bounds = array<i64: 256, 256>}, {pipeline_mode = #tpu.pipeline_mode<synchronous>, transform_indices = @transform_1, window_bounds = array<i64: 256, 128>}, {pipeline_mode = #tpu.pipeline_mode<synchronous>, transform_indices = @transform_2, window_bounds = array<i64: 128, 128>}, {transform_indices = @transform_3, window_bounds = array<i64: 256, 128>}, {transform_indices = @transform_4, window_bounds = array<i64: 256, 128>}]} {
    %c0_i32 = arith.constant 0 : i32
    %0 = arith.cmpi eq, %arg1, %c0_i32 : i32
    %1 = arith.extui %0 : i1 to i32
    %c0_i32_0 = arith.constant 0 : i32
    %2 = arith.cmpi ne, %1, %c0_i32_0 : i32
    scf.if %2 {
      %cst_12 = arith.constant 0.000000e+00 : f32
      %18 = vector.broadcast %cst_12 : f32 to vector<256x128xf32>
      %c0_13 = arith.constant 0 : index
      %c0_14 = arith.constant 0 : index
      %19 = vector.load %arg7[%c0_13, %c0_14] : memref<256x128xf32, #tpu.memory_space<vmem>>, vector<256x128xf32>
      tpu.vector_store %arg7[%c0_13, %c0_14], %18 {strides = array<i32>} : memref<256x128xf32, #tpu.memory_space<vmem>>, vector<256x128xf32>,
    } else {
    }
    %c256_i32 = arith.constant 256 : i32
    %3 = arith.muli %arg1, %c256_i32 : i32
    %4 = tpu.assume_multiple %3, 256 : i32
    %5 = arith.index_cast %4 : i32 to index
    %c0 = arith.constant 0 : index
    %6 = vector.load %arg3[%5, %c0] : memref<256x128xbf16, #tpu.memory_space<vmem>>, vector<256x128xbf16>
    %c0_1 = arith.constant 0 : index
    %c0_2 = arith.constant 0 : index
    %7 = vector.load %arg4[%c0_1, %c0_2] : memref<128x128xbf16, #tpu.memory_space<vmem>>, vector<128x128xbf16>
    %cst = arith.constant dense<0.000000e+00> : vector<256x128xf32>
    %8 = tpu.matmul %6, %7, %cst {dimension_numbers = #tpu.dot_dimension_numbers<[1], [0], [0], [1], [0, 0, 1, 1], [], []>} : vector<256x128xbf16>, vector<128x128xbf16>, vector<256x128xf32> -> vector<256x128xf32>
    %9 = arith.truncf %8 : vector<256x128xf32> to vector<256x128xbf16>
    %c0_3 = arith.constant 0 : index
    %c0_4 = arith.constant 0 : index
    %10 = vector.load %arg7[%c0_3, %c0_4] : memref<256x128xf32, #tpu.memory_space<vmem>>, vector<256x128xf32>
    %c0_5 = arith.constant 0 : index
    %c0_6 = arith.constant 0 : index
    %11 = vector.load %arg2[%c0_5, %c0_6] : memref<256x256xbf16, #tpu.memory_space<vmem>>, vector<256x256xbf16>
    %cst_7 = arith.constant dense<0.000000e+00> : vector<256x128xf32>
    %12 = tpu.matmul %11, %9, %cst_7 {dimension_numbers = #tpu.dot_dimension_numbers<[1], [0], [0], [1], [0, 0, 1, 1], [], []>} : vector<256x256xbf16>, vector<256x128xbf16>, vector<256x128xf32> -> vector<256x128xf32>
    %13 = arith.addf %10, %12 : vector<256x128xf32>
    %c0_8 = arith.constant 0 : index
    %c0_9 = arith.constant 0 : index
    %14 = vector.load %arg7[%c0_8, %c0_9] : memref<256x128xf32, #tpu.memory_space<vmem>>, vector<256x128xf32>
    tpu.vector_store %arg7[%c0_8, %c0_9], %13 {strides = array<i32>} : memref<256x128xf32, #tpu.memory_space<vmem>>, vector<256x128xf32>,
    %c0_i32_10 = arith.constant 0 : i32
    %15 = arith.cmpi eq, %arg1, %c0_i32_10 : i32
    %16 = arith.extui %15 : i1 to i32
    %c0_i32_11 = arith.constant 0 : i32
    %17 = arith.cmpi ne, %16, %c0_i32_11 : i32
    scf.if %17 {
      %c0_12 = arith.constant 0 : index
      %c0_13 = arith.constant 0 : index
      %18 = vector.load %arg7[%c0_12, %c0_13] : memref<256x128xf32, #tpu.memory_space<vmem>>, vector<256x128xf32>
      %c0_14 = arith.constant 0 : index
      %c0_15 = arith.constant 0 : index
      %19 = vector.load %arg5[%c0_14, %c0_15] : memref<256x128xf32, #tpu.memory_space<vmem>>, vector<256x128xf32>
      %20 = arith.addf %18, %19 : vector<256x128xf32>
      %cst_16 = arith.constant 0.000000e+00 : f32
      %21 = vector.broadcast %cst_16 : f32 to vector<256x128xf32>
      %22 = arith.maximumf %20, %21 : vector<256x128xf32>
      %23 = arith.truncf %22 : vector<256x128xf32> to vector<256x128xbf16>
      %c0_17 = arith.constant 0 : index
      %c0_18 = arith.constant 0 : index
      %24 = vector.load %arg6[%c0_17, %c0_18] : memref<256x128xbf16, #tpu.memory_space<vmem>>, vector<256x128xbf16>
      tpu.vector_store %arg6[%c0_17, %c0_18], %23 {strides = array<i32>} : memref<256x128xbf16, #tpu.memory_space<vmem>>, vector<256x128xbf16>,
    } else {
    }
    return
  }
  func.func @transform_0(%arg0: i32, %arg1: i32) -> (i32, i32) {
    %c0_i32 = arith.constant 0 : i32
    return %arg0, %arg1 : i32, i32
  }
  func.func @transform_1(%arg0: i32, %arg1: i32) -> (i32, i32) {
    %c0_i32 = arith.constant 0 : i32
    %c0_i32_0 = arith.constant 0 : i32
    %c0_i32_1 = arith.constant 0 : i32
    return %c0_i32, %c0_i32_0 : i32, i32
  }
  func.func @transform_2(%arg0: i32, %arg1: i32) -> (i32, i32) {
    %c0_i32 = arith.constant 0 : i32
    %c0_i32_0 = arith.constant 0 : i32
    %c0_i32_1 = arith.constant 0 : i32
    return %c0_i32, %c0_i32_0 : i32, i32
  }
  func.func @transform_3(%arg0: i32, %arg1: i32) -> (i32, i32) {
    %c0_i32 = arith.constant 0 : i32
    %c0_i32_0 = arith.constant 0 : i32
    return %arg0, %c0_i32 : i32, i32
  }
  func.func @transform_4(%arg0: i32, %arg1: i32) -> (i32, i32) {
    %c0_i32 = arith.constant 0 : i32
    %c0_i32_0 = arith.constant 0 : i32
    return %arg0, %c0_i32 : i32, i32
  }
}

module attributes {stable_mosaic.version = 11 : i64} {
  func.func @_pool_head_kernel(%arg0: i32, %arg1: memref<4x256xbf16, #tpu.memory_space<vmem>>, %arg2: memref<256x128xbf16, #tpu.memory_space<vmem>>, %arg3: memref<128x128xbf16, #tpu.memory_space<vmem>>, %arg4: memref<1x128xf32, #tpu.memory_space<vmem>>, %arg5: memref<4x128xf32, #tpu.memory_space<vmem>>, %arg6: memref<4x128xf32, #tpu.memory_space<vmem>>) attributes {dimension_semantics = [#tpu.dimension_semantics<arbitrary>], iteration_bounds = array<i64: 1>, scalar_prefetch = 0 : i64, scratch_operands = 1 : i64, tpu.core_type = #tpu.core_type<tc>, window_params = [{transform_indices = @transform_0, window_bounds = array<i64: 4, 256>}, {transform_indices = @transform_1, window_bounds = array<i64: 256, 128>}, {pipeline_mode = #tpu.pipeline_mode<synchronous>, transform_indices = @transform_2, window_bounds = array<i64: 128, 128>}, {pipeline_mode = #tpu.pipeline_mode<synchronous>, transform_indices = @transform_3, window_bounds = array<i64: 1, 128>}, {pipeline_mode = #tpu.pipeline_mode<synchronous>, transform_indices = @transform_4, window_bounds = array<i64: 4, 128>}]} {
    %c0_i32 = arith.constant 0 : i32
    %0 = arith.cmpi eq, %arg0, %c0_i32 : i32
    %1 = arith.extui %0 : i1 to i32
    %c0_i32_0 = arith.constant 0 : i32
    %2 = arith.cmpi ne, %1, %c0_i32_0 : i32
    scf.if %2 {
      %cst_10 = arith.constant 0.000000e+00 : f32
      %12 = vector.broadcast %cst_10 : f32 to vector<4x128xf32>
      %c0_11 = arith.constant 0 : index
      %c0_12 = arith.constant 0 : index
      %13 = vector.load %arg6[%c0_11, %c0_12] : memref<4x128xf32, #tpu.memory_space<vmem>>, vector<4x128xf32>
      tpu.vector_store %arg6[%c0_11, %c0_12], %12 {strides = array<i32>} : memref<4x128xf32, #tpu.memory_space<vmem>>, vector<4x128xf32>,
    } else {
    }
    %c0 = arith.constant 0 : index
    %c0_1 = arith.constant 0 : index
    %3 = vector.load %arg6[%c0, %c0_1] : memref<4x128xf32, #tpu.memory_space<vmem>>, vector<4x128xf32>
    %c0_2 = arith.constant 0 : index
    %c0_3 = arith.constant 0 : index
    %4 = vector.load %arg1[%c0_2, %c0_3] : memref<4x256xbf16, #tpu.memory_space<vmem>>, vector<4x256xbf16>
    %c0_4 = arith.constant 0 : index
    %c0_5 = arith.constant 0 : index
    %5 = vector.load %arg2[%c0_4, %c0_5] : memref<256x128xbf16, #tpu.memory_space<vmem>>, vector<256x128xbf16>
    %cst = arith.constant dense<0.000000e+00> : vector<4x128xf32>
    %6 = tpu.matmul %4, %5, %cst {dimension_numbers = #tpu.dot_dimension_numbers<[1], [0], [0], [1], [0, 0, 1, 1], [], []>} : vector<4x256xbf16>, vector<256x128xbf16>, vector<4x128xf32> -> vector<4x128xf32>
    %7 = arith.addf %3, %6 : vector<4x128xf32>
    %c0_6 = arith.constant 0 : index
    %c0_7 = arith.constant 0 : index
    %8 = vector.load %arg6[%c0_6, %c0_7] : memref<4x128xf32, #tpu.memory_space<vmem>>, vector<4x128xf32>
    tpu.vector_store %arg6[%c0_6, %c0_7], %7 {strides = array<i32>} : memref<4x128xf32, #tpu.memory_space<vmem>>, vector<4x128xf32>,
    %c0_i32_8 = arith.constant 0 : i32
    %9 = arith.cmpi eq, %arg0, %c0_i32_8 : i32
    %10 = arith.extui %9 : i1 to i32
    %c0_i32_9 = arith.constant 0 : i32
    %11 = arith.cmpi ne, %10, %c0_i32_9 : i32
    scf.if %11 {
      %c0_10 = arith.constant 0 : index
      %c0_11 = arith.constant 0 : index
      %12 = vector.load %arg6[%c0_10, %c0_11] : memref<4x128xf32, #tpu.memory_space<vmem>>, vector<4x128xf32>
      %13 = arith.truncf %12 : vector<4x128xf32> to vector<4x128xbf16>
      %c0_12 = arith.constant 0 : index
      %c0_13 = arith.constant 0 : index
      %14 = vector.load %arg3[%c0_12, %c0_13] : memref<128x128xbf16, #tpu.memory_space<vmem>>, vector<128x128xbf16>
      %cst_14 = arith.constant dense<0.000000e+00> : vector<4x128xf32>
      %15 = tpu.matmul %13, %14, %cst_14 {dimension_numbers = #tpu.dot_dimension_numbers<[1], [0], [0], [1], [0, 0, 1, 1], [], []>} : vector<4x128xbf16>, vector<128x128xbf16>, vector<4x128xf32> -> vector<4x128xf32>
      %c0_15 = arith.constant 0 : index
      %c0_16 = arith.constant 0 : index
      %16 = vector.load %arg4[%c0_15, %c0_16] : memref<1x128xf32, #tpu.memory_space<vmem>>, vector<1x128xf32>
      %17 = vector.broadcast %16 : vector<1x128xf32> to vector<4x128xf32>
      %18 = arith.addf %15, %17 : vector<4x128xf32>
      %c0_17 = arith.constant 0 : index
      %c0_18 = arith.constant 0 : index
      %19 = vector.load %arg5[%c0_17, %c0_18] : memref<4x128xf32, #tpu.memory_space<vmem>>, vector<4x128xf32>
      tpu.vector_store %arg5[%c0_17, %c0_18], %18 {strides = array<i32>} : memref<4x128xf32, #tpu.memory_space<vmem>>, vector<4x128xf32>,
    } else {
    }
    return
  }
  func.func @transform_0(%arg0: i32) -> (i32, i32) {
    %c0_i32 = arith.constant 0 : i32
    %c0_i32_0 = arith.constant 0 : i32
    return %c0_i32, %arg0 : i32, i32
  }
  func.func @transform_1(%arg0: i32) -> (i32, i32) {
    %c0_i32 = arith.constant 0 : i32
    %c0_i32_0 = arith.constant 0 : i32
    return %arg0, %c0_i32 : i32, i32
  }
  func.func @transform_2(%arg0: i32) -> (i32, i32) {
    %c0_i32 = arith.constant 0 : i32
    %c0_i32_0 = arith.constant 0 : i32
    %c0_i32_1 = arith.constant 0 : i32
    return %c0_i32, %c0_i32_0 : i32, i32
  }
  func.func @transform_3(%arg0: i32) -> (i32, i32) {
    %c0_i32 = arith.constant 0 : i32
    %c0_i32_0 = arith.constant 0 : i32
    %c0_i32_1 = arith.constant 0 : i32
    return %c0_i32, %c0_i32_0 : i32, i32
  }
  func.func @transform_4(%arg0: i32) -> (i32, i32) {
    %c0_i32 = arith.constant 0 : i32
    %c0_i32_0 = arith.constant 0 : i32
    %c0_i32_1 = arith.constant 0 : i32
    return %c0_i32, %c0_i32_0 : i32, i32
  }
}

</mosaic_0001>

<llo_original>
// kernel: gcn_forward.7
$region0: #{gcn_forward.7}
  #allocation0 [shape = 'u32[]', space=smem, size = 0x4, offset = 0x4, fixed_abs, tag = 'smem constant byte address 0x4 - core index']
  #allocation1 [shape = 'u32[144,128]{1,0:T(1,128)}', space=vmem, size = 0x12000, scoped, tag = 'internal scratch']
  #allocation2 [shape = 'f32[4,128]{1,0:T(4,128)}', space=vmem, size = 0x800, scoped, tag = 'scratch operand']
  %s0 = inlined_call_operand.vmem [shape: bf16[4,256], index: 0, kind: input, shape index: {}]
  %s1 = inlined_call_operand.vmem [shape: bf16[256,128], index: 1, kind: input, shape index: {}]
  %s2 = inlined_call_operand.vmem [shape: bf16[128,128], index: 2, kind: input, shape index: {}]
  %s3 = inlined_call_operand.vmem [shape: f32[1,128], index: 3, kind: input, shape index: {}]
  %s4 = inlined_call_operand.vmem [shape: f32[4,128], index: 4, kind: output, shape index: {}]
  %s5 = sld [smem:[#allocation0]]
  $region34: #{gcn_forward.7} parent=0
    _
  %s7 = ssub.s32 1, %s5
  %s8 = scalar_select 0, %s7, %s5
  // Predicated region
  $region2: #{gcn_forward.7} parent=0 // pred_check
    _
  $region3: #{gcn_forward.7} parent=0 // pred_check_branch
    %10 = sbr.rel (0) target = $region5
  $region4: #{gcn_forward.7} parent=0 // pred_region
    _
  $region5: #{gcn_forward.7} parent=0 // pred_fallthru
    _
  // Predicated region
  $region6: #{gcn_forward.7} parent=0 // pred_check
    _
  $region7: #{gcn_forward.7} parent=0 // pred_check_branch
    %12 = sbr.rel (0) target = $region9
  $region8: #{gcn_forward.7} parent=0 // pred_region
    _
  $region9: #{gcn_forward.7} parent=0 // pred_fallthru
    _
  // Predicated region
  $region10: #{gcn_forward.7} parent=0 // pred_check
    _
  $region11: #{gcn_forward.7} parent=0 // pred_check_branch
    %14 = sbr.rel (0) target = $region13
  $region12: #{gcn_forward.7} parent=0 // pred_region
    _
  $region13: #{gcn_forward.7} parent=0 // pred_fallthru
    _
  // Predicated region
  $region14: #{gcn_forward.7} parent=0 // pred_check
    _
  $region15: #{gcn_forward.7} parent=0 // pred_check_branch
    %16 = sbr.rel (0) target = $region17
  $region16: #{gcn_forward.7} parent=0 // pred_region
    _
  $region17: #{gcn_forward.7} parent=0 // pred_fallthru
    _
  %p18 = scmp.eq.s32.totalorder 0, 0
  // Predicated region
  $region18: #{gcn_forward.7} parent=0 // pred_check
    %p19 = pneg %p18
  $region19: #{gcn_forward.7} parent=0 // pred_check_branch
    %21 = sbr.rel (%p19) target = $region21
  $region20: #{gcn_forward.7} parent=0 // pred_region
    %22 = vst [vmem:[#allocation2] sm:$0xf] 0.0
  $region21: #{gcn_forward.7} parent=0 // pred_fallthru
    _
  %v23 = vld [vmem:[#allocation2] sm:$0xf]
  %v24 = vld [vmem:[%s0] sm:$0xf]
  %v25 = vld [vmem:[%s1] sm:$0xf]
  %v26 = vld [vmem:[%s1 + $0x4] sm:$0xf]
  %v27 = vld [vmem:[%s1 + $0x8] sm:$0xf]
  %v28 = vld [vmem:[%s1 + $0xc] sm:$0xf]
  %v29 = vld [vmem:[%s1 + $0x10] sm:$0xf]
  %v30 = vld [vmem:[%s1 + $0x14] sm:$0xf]
  %v31 = vld [vmem:[%s1 + $0x18] sm:$0xf]
  %v32 = vld [vmem:[%s1 + $0x1c] sm:$0xf]
  %v33 = vld [vmem:[%s1 + $0x20] sm:$0xf]
  %v34 = vld [vmem:[%s1 + $0x24] sm:$0xf]
  %v35 = vld [vmem:[%s1 + $0x28] sm:$0xf]
  %v36 = vld [vmem:[%s1 + $0x2c] sm:$0xf]
  %v37 = vld [vmem:[%s1 + $0x30] sm:$0xf]
  %v38 = vld [vmem:[%s1 + $0x34] sm:$0xf]
  %v39 = vld [vmem:[%s1 + $0x38] sm:$0xf]
  %v40 = vld [vmem:[%s1 + $0x3c] sm:$0xf]
  %v41 = vld [vmem:[%s1 + $0x40] sm:$0xf]
  %v42 = vld [vmem:[%s1 + $0x44] sm:$0xf]
  %v43 = vld [vmem:[%s1 + $0x48] sm:$0xf]
  %v44 = vld [vmem:[%s1 + $0x4c] sm:$0xf]
  %v45 = vld [vmem:[%s1 + $0x50] sm:$0xf]
  %v46 = vld [vmem:[%s1 + $0x54] sm:$0xf]
  %v47 = vld [vmem:[%s1 + $0x58] sm:$0xf]
  %v48 = vld [vmem:[%s1 + $0x5c] sm:$0xf]
  %v49 = vld [vmem:[%s1 + $0x60] sm:$0xf]
  %v50 = vld [vmem:[%s1 + $0x64] sm:$0xf]
  %v51 = vld [vmem:[%s1 + $0x68] sm:$0xf]
  %v52 = vld [vmem:[%s1 + $0x6c] sm:$0xf]
  %v53 = vld [vmem:[%s1 + $0x70] sm:$0xf]
  %v54 = vld [vmem:[%s1 + $0x74] sm:$0xf]
  %v55 = vld [vmem:[%s1 + $0x78] sm:$0xf]
  %v56 = vld [vmem:[%s1 + $0x7c] sm:$0xf]
  %v59 = vunpack.c.l.s4 1983009808
  %v60 = vunpack.c.0.s8 %v59
  %v61 = vlaneseq
  %v62 = vshrl.u32 %v61, 7
  %v63 = vsub.s32 %v60, %v62
  %v64 = vrot.slane %v24, %v63
  %v65 = vcombine.high %v64, %v64
  %v100 = vunpack.c.l.b16 %v25
  %v101 = vunpack.c.l.b16 %v26
  %v102 = vunpack.c.l.b16 %v27
  %v103 = vunpack.c.l.b16 %v28
  %v104 = vunpack.c.l.b16 %v29
  %v105 = vunpack.c.l.b16 %v30
  %v106 = vunpack.c.l.b16 %v31
  %v107 = vunpack.c.l.b16 %v32
  %v108 = vunpack.c.l.b16 %v33
  %v109 = vunpack.c.l.b16 %v34
  %v110 = vunpack.c.l.b16 %v35
  %v111 = vunpack.c.l.b16 %v36
  %v112 = vunpack.c.l.b16 %v37
  %v113 = vunpack.c.l.b16 %v38
  %v114 = vunpack.c.l.b16 %v39
  %v115 = vunpack.c.l.b16 %v40
  %v116 = vunpack.c.l.b16 %v41
  %v117 = vunpack.c.l.b16 %v42
  %v118 = vunpack.c.l.b16 %v43
  %v119 = vunpack.c.l.b16 %v44
  %v120 = vunpack.c.l.b16 %v45
  %v121 = vunpack.c.l.b16 %v46
  %v122 = vunpack.c.l.b16 %v47
  %v123 = vunpack.c.l.b16 %v48
  %v124 = vunpack.c.l.b16 %v49
  %v125 = vunpack.c.l.b16 %v50
  %v126 = vunpack.c.l.b16 %v51
  %v127 = vunpack.c.l.b16 %v52
  %v128 = vunpack.c.l.b16 %v53
  %v129 = vunpack.c.l.b16 %v54
  %v130 = vunpack.c.l.b16 %v55
  %v131 = vunpack.c.l.b16 %v56
  %v132 = vpack.c.b16 %v101, %v100
  %v133 = vpack.c.b16 %v103, %v102
  %v134 = vpack.c.b16 %v105, %v104
  %v135 = vpack.c.b16 %v107, %v106
  %v136 = vpack.c.b16 %v109, %v108
  %v137 = vpack.c.b16 %v111, %v110
  %v138 = vpack.c.b16 %v113, %v112
  %v139 = vpack.c.b16 %v115, %v114
  %v140 = vpack.c.b16 %v117, %v116
  %v141 = vpack.c.b16 %v119, %v118
  %v142 = vpack.c.b16 %v121, %v120
  %v143 = vpack.c.b16 %v123, %v122
  %v144 = vpack.c.b16 %v125, %v124
  %v145 = vpack.c.b16 %v127, %v126
  %v146 = vpack.c.b16 %v129, %v128
  %v147 = vpack.c.b16 %v131, %v130
  %164 = vmatprep.subr.bf16.mxu0 0
  %165 = vmatpush1.bf16.msra.mxu0 %v132
  %166 = vmatprep.subr.bf16.mxu0 0
  %167 = vmatpush1.bf16.msra.mxu0 %v133
  %168 = vmatprep.subr.bf16.mxu0 0
  %169 = vmatpush1.bf16.msra.mxu0 %v134
  %170 = vmatprep.subr.bf16.mxu0 0
  %171 = vmatpush1.bf16.msra.mxu0 %v135
  %172 = vmatprep.subr.bf16.mxu0 0
  %173 = vmatpush1.bf16.msra.mxu0 %v136
  %174 = vmatprep.subr.bf16.mxu0 0
  %175 = vmatpush1.bf16.msra.mxu0 %v137
  %176 = vmatprep.subr.bf16.mxu0 0
  %177 = vmatpush1.bf16.msra.mxu0 %v138
  %178 = vmatprep.subr.bf16.mxu0 0
  %179 = vmatpush1.bf16.msra.mxu0 %v139
  %180 = vmatprep.subr.bf16.mxu0 0
  %181 = vmatpush1.bf16.msra.mxu0 %v140
  %182 = vmatprep.subr.bf16.mxu0 0
  %183 = vmatpush1.bf16.msra.mxu0 %v141
  %184 = vmatprep.subr.bf16.mxu0 0
  %185 = vmatpush1.bf16.msra.mxu0 %v142
  %186 = vmatprep.subr.bf16.mxu0 0
  %187 = vmatpush1.bf16.msra.mxu0 %v143
  %188 = vmatprep.subr.bf16.mxu0 0
  %189 = vmatpush1.bf16.msra.mxu0 %v144
  %190 = vmatprep.subr.bf16.mxu0 0
  %191 = vmatpush1.bf16.msra.mxu0 %v145
  %192 = vmatprep.subr.bf16.mxu0 0
  %193 = vmatpush1.bf16.msra.mxu0 %v146
  %194 = vmatprep.subr.bf16.mxu0 0
  %195 = vmatpush1.bf16.msra.mxu0 %v147
  %196 = vmatprep.mubr.bf16.mxu0 %v65
  %197 = vmatmul.mubr.bf16.gmra.mrb[0].mxu0 %v64
  %v198 = vpop.f32.mrb[0].mxu0
  %v199 = vadd.f32 0.0, %v198
  %v200 = vpop.f32.mrb[0].mxu0
  %v201 = vpop.f32.mrb[0].mxu0
  %v202 = vpop.f32.mrb[0].mxu0
  %203 = vdwg.mxu0
  %v204 = vadd.f32 %v23, %v199
  %205 = vst [vmem:[#allocation2] sm:$0xf] %v204
  // Predicated region
  $region22: #{gcn_forward.7} parent=0 // pred_check
    %p206 = pneg %p18
  $region23: #{gcn_forward.7} parent=0 // pred_check_branch
    %208 = sbr.rel (%p206) target = $region25
  $region24: #{gcn_forward.7} parent=0 // pred_region
    %v209 = vld [vmem:[#allocation2] sm:$0xf]
    %v210 = vpack.c.bf16 %v209, %v209
    %v211 = vld [vmem:[%s2] sm:$0xf]
    %v212 = vld [vmem:[%s2 + $0x4] sm:$0xf]
    %v213 = vld [vmem:[%s2 + $0x8] sm:$0xf]
    %v214 = vld [vmem:[%s2 + $0xc] sm:$0xf]
    %v215 = vld [vmem:[%s2 + $0x10] sm:$0xf]
    %v216 = vld [vmem:[%s2 + $0x14] sm:$0xf]
    %v217 = vld [vmem:[%s2 + $0x18] sm:$0xf]
    %v218 = vld [vmem:[%s2 + $0x1c] sm:$0xf]
    %v219 = vld [vmem:[%s2 + $0x20] sm:$0xf]
    %v220 = vld [vmem:[%s2 + $0x24] sm:$0xf]
    %v221 = vld [vmem:[%s2 + $0x28] sm:$0xf]
    %v222 = vld [vmem:[%s2 + $0x2c] sm:$0xf]
    %v223 = vld [vmem:[%s2 + $0x30] sm:$0xf]
    %v224 = vld [vmem:[%s2 + $0x34] sm:$0xf]
    %v225 = vld [vmem:[%s2 + $0x38] sm:$0xf]
    %v226 = vld [vmem:[%s2 + $0x3c] sm:$0xf]
    %v227 = vld [vmem:[%s3] sm:$0x1]
    %v229 = vlaneseq
    %v230 = vshrl.u32 %v229, 7
    %v231 = vsub.s32 0, %v230
    %v232 = vrot.slane %v227, %v231
    %v250 = vunpack.c.l.b16 %v211
    %v251 = vunpack.c.l.b16 %v212
    %v252 = vunpack.c.l.b16 %v213
    %v253 = vunpack.c.l.b16 %v214
    %v254 = vunpack.c.l.b16 %v215
    %v255 = vunpack.c.l.b16 %v216
    %v256 = vunpack.c.l.b16 %v217
    %v257 = vunpack.c.l.b16 %v218
    %v258 = vunpack.c.l.b16 %v219
    %v259 = vunpack.c.l.b16 %v220
    %v260 = vunpack.c.l.b16 %v221
    %v261 = vunpack.c.l.b16 %v222
    %v262 = vunpack.c.l.b16 %v223
    %v263 = vunpack.c.l.b16 %v224
    %v264 = vunpack.c.l.b16 %v225
    %v265 = vunpack.c.l.b16 %v226
    %v266 = vpack.c.b16 %v251, %v250
    %v267 = vpack.c.b16 %v253, %v252
    %v268 = vpack.c.b16 %v255, %v254
    %v269 = vpack.c.b16 %v257, %v256
    %v270 = vpack.c.b16 %v259, %v258
    %v271 = vpack.c.b16 %v261, %v260
    %v272 = vpack.c.b16 %v263, %v262
    %v273 = vpack.c.b16 %v265, %v264
    %282 = vmatprep.subr.bf16.mxu0 0
    %283 = vmatpush1.bf16.msra.mxu0 %v266
    %284 = vmatprep.subr.bf16.mxu0 0
    %285 = vmatpush1.bf16.msra.mxu0 %v267
    %286 = vmatprep.subr.bf16.mxu0 0
    %287 = vmatpush1.bf16.msra.mxu0 %v268
    %288 = vmatprep.subr.bf16.mxu0 0
    %289 = vmatpush1.bf16.msra.mxu0 %v269
    %290 = vmatprep.subr.bf16.mxu0 0
    %291 = vmatpush1.bf16.msra.mxu0 %v270
    %292 = vmatprep.subr.bf16.mxu0 0
    %293 = vmatpush1.bf16.msra.mxu0 %v271
    %294 = vmatprep.subr.bf16.mxu0 0
    %295 = vmatpush1.bf16.msra.mxu0 %v272
    %296 = vmatprep.subr.bf16.mxu0 0
    %297 = vmatpush1.bf16.msra.mxu0 %v273
    %298 = vmatprep.subr.bf16.mxu0 0
    %299 = vmatpush1.bf16.msra.mxu0 0
    %300 = vmatprep.subr.bf16.mxu0 0
    %301 = vmatpush1.bf16.msra.mxu0 0
    %302 = vmatprep.subr.bf16.mxu0 0
    %303 = vmatpush1.bf16.msra.mxu0 0
    %304 = vmatprep.subr.bf16.mxu0 0
    %305 = vmatpush1.bf16.msra.mxu0 0
    %306 = vmatprep.subr.bf16.mxu0 0
    %307 = vmatpush1.bf16.msra.mxu0 0
    %308 = vmatprep.subr.bf16.mxu0 0
    %309 = vmatpush1.bf16.msra.mxu0 0
    %310 = vmatprep.subr.bf16.mxu0 0
    %311 = vmatpush1.bf16.msra.mxu0 0
    %312 = vmatprep.subr.bf16.mxu0 0
    %313 = vmatpush1.bf16.msra.mxu0 0
    %314 = vmatprep.mubr.bf16.mxu0 0
    %315 = vmatmul.mubr.bf16.gmra.mrb[0].mxu0 %v210
    %v316 = vpop.f32.mrb[0].mxu0
    %v317 = vadd.f32 %v232, %v316
    %v318 = vpop.f32.mrb[0].mxu0
    %v319 = vpop.f32.mrb[0].mxu0
    %v320 = vpop.f32.mrb[0].mxu0
    %321 = vdwg.mxu0
    %322 = vst [vmem:[%s4] sm:$0xf] %v317
  $region25: #{gcn_forward.7} parent=0 // pred_fallthru
    _
  // Predicated region
  $region26: #{gcn_forward.7} parent=0 // pred_check
    _
  $region27: #{gcn_forward.7} parent=0 // pred_check_branch
    %324 = sbr.rel (0) target = $region29
  $region28: #{gcn_forward.7} parent=0 // pred_region
    _
  $region29: #{gcn_forward.7} parent=0 // pred_fallthru
    _
  // Predicated region
  $region30: #{gcn_forward.7} parent=0 // pred_check
    _
  $region31: #{gcn_forward.7} parent=0 // pred_check_branch
    %326 = sbr.rel (0) target = $region33
  $region32: #{gcn_forward.7} parent=0 // pred_region
    _
  $region33: #{gcn_forward.7} parent=0 // pred_fallthru
    _

// kernel: gcn_forward.6
$region0: #{gcn_forward.6}
  #allocation0 [shape = 'u32[]', space=smem, size = 0x4, offset = 0x4, fixed_abs, tag = 'smem constant byte address 0x4 - core index']
  #allocation1 [shape = 'u32[144,128]{1,0:T(1,128)}', space=vmem, size = 0x12000, scoped, tag = 'internal scratch']
  #allocation2 [shape = 'f32[256,128]{1,0:T(8,128)}', space=vmem, size = 0x20000, scoped, tag = 'scratch operand']
  %s0 = inlined_call_operand.vmem [shape: bf16[256,256], index: 0, kind: input, shape index: {}]
  %s1 = inlined_call_operand.vmem [shape: bf16[256,128], index: 1, kind: input, shape index: {}]
  %s2 = inlined_call_operand.vmem [shape: bf16[128,128], index: 2, kind: input, shape index: {}]
  %s3 = inlined_call_operand.vmem [shape: f32[256,128], index: 3, kind: input, shape index: {}]
  %s4 = inlined_call_operand.vmem [shape: bf16[256,128], index: 4, kind: output, shape index: {}]
  %s5 = sld [smem:[#allocation0]]
  $region34: #{gcn_forward.6} parent=0
    _
  %s7 = ssub.s32 1, %s5
  %s8 = scalar_select 0, %s7, %s5
  // Predicated region
  $region2: #{gcn_forward.6} parent=0 // pred_check
    _
  $region3: #{gcn_forward.6} parent=0 // pred_check_branch
    %10 = sbr.rel (0) target = $region5
  $region4: #{gcn_forward.6} parent=0 // pred_region
    _
  $region5: #{gcn_forward.6} parent=0 // pred_fallthru
    _
  // Predicated region
  $region6: #{gcn_forward.6} parent=0 // pred_check
    _
  $region7: #{gcn_forward.6} parent=0 // pred_check_branch
    %12 = sbr.rel (0) target = $region9
  $region8: #{gcn_forward.6} parent=0 // pred_region
    _
  $region9: #{gcn_forward.6} parent=0 // pred_fallthru
    _
  // Predicated region
  $region10: #{gcn_forward.6} parent=0 // pred_check
    _
  $region11: #{gcn_forward.6} parent=0 // pred_check_branch
    %14 = sbr.rel (0) target = $region13
  $region12: #{gcn_forward.6} parent=0 // pred_region
    _
  $region13: #{gcn_forward.6} parent=0 // pred_fallthru
    _
  // Predicated region
  $region14: #{gcn_forward.6} parent=0 // pred_check
    _
  $region15: #{gcn_forward.6} parent=0 // pred_check_branch
    %16 = sbr.rel (0) target = $region17
  $region16: #{gcn_forward.6} parent=0 // pred_region
    _
  $region17: #{gcn_forward.6} parent=0 // pred_fallthru
    _
  %p18 = scmp.eq.s32.totalorder 0, 0
  // Predicated region
  $region18: #{gcn_forward.6} parent=0 // pred_check
    %p19 = pneg %p18
  $region19: #{gcn_forward.6} parent=0 // pred_check_branch
    %21 = sbr.rel (%p19) target = $region21
  $region20: #{gcn_forward.6} parent=0 // pred_region
    %22 = vst [vmem:[#allocation2] sm:$0xff] 0.0
    %23 = vst [vmem:[#allocation2 + $0x8] sm:$0xff] 0.0
    %24 = vst [vmem:[#allocation2 + $0x10] sm:$0xff] 0.0
    %25 = vst [vmem:[#allocation2 + $0x18] sm:$0xff] 0.0
    %26 = vst [vmem:[#allocation2 + $0x20] sm:$0xff] 0.0
    %27 = vst [vmem:[#allocation2 + $0x28] sm:$0xff] 0.0
    %28 = vst [vmem:[#allocation2 + $0x30] sm:$0xff] 0.0
    %29 = vst [vmem:[#allocation2 + $0x38] sm:$0xff] 0.0
    %30 = vst [vmem:[#allocation2 + $0x40] sm:$0xff] 0.0
    %31 = vst [vmem:[#allocation2 + $0x48] sm:$0xff] 0.0
    %32 = vst [vmem:[#allocation2 + $0x50] sm:$0xff] 0.0
    %33 = vst [vmem:[#allocation2 + $0x58] sm:$0xff] 0.0
    %34 = vst [vmem:[#allocation2 + $0x60] sm:$0xff] 0.0
    %35 = vst [vmem:[#allocation2 + $0x68] sm:$0xff] 0.0
    %36 = vst [vmem:[#allocation2 + $0x70] sm:$0xff] 0.0
    %37 = vst [vmem:[#allocation2 + $0x78] sm:$0xff] 0.0
    %38 = vst [vmem:[#allocation2 + $0x80] sm:$0xff] 0.0
    %39 = vst [vmem:[#allocation2 + $0x88] sm:$0xff] 0.0
    %40 = vst [vmem:[#allocation2 + $0x90] sm:$0xff] 0.0
    %41 = vst [vmem:[#allocation2 + $0x98] sm:$0xff] 0.0
    %42 = vst [vmem:[#allocation2 + $0xa0] sm:$0xff] 0.0
    %43 = vst [vmem:[#allocation2 + $0xa8] sm:$0xff] 0.0
    %44 = vst [vmem:[#allocation2 + $0xb0] sm:$0xff] 0.0
    %45 = vst [vmem:[#allocation2 + $0xb8] sm:$0xff] 0.0
    %46 = vst [vmem:[#allocation2 + $0xc0] sm:$0xff] 0.0
    %47 = vst [vmem:[#allocation2 + $0xc8] sm:$0xff] 0.0
    %48 = vst [vmem:[#allocation2 + $0xd0] sm:$0xff] 0.0
    %49 = vst [vmem:[#allocation2 + $0xd8] sm:$0xff] 0.0
    %50 = vst [vmem:[#allocation2 + $0xe0] sm:$0xff] 0.0
    %51 = vst [vmem:[#allocation2 + $0xe8] sm:$0xff] 0.0
    %52 = vst [vmem:[#allocation2 + $0xf0] sm:$0xff] 0.0
    %53 = vst [vmem:[#allocation2 + $0xf8] sm:$0xff] 0.0
  $region21: #{gcn_forward.6} parent=0 // pred_fallthru
    _
  %s54 = smul.u32 0, 256
  %s55 = sshra.s32 %s54, 3
  %s56 = sand.u32 %s54, 7
  %s57 = smul.addr %s55, 4
  %s58 = scalar_lea.vmem %s1, %s57
  %v59 = vld [vmem:[%s58] sm:$0xf]
  %v60 = vld [vmem:[%s58 + $0x4] sm:$0xf]
  %v61 = vld [vmem:[%s58 + $0x8] sm:$0xf]
  %v62 = vld [vmem:[%s58 + $0xc] sm:$0xf]
  %v63 = vld [vmem:[%s58 + $0x10] sm:$0xf]
  %v64 = vld [vmem:[%s58 + $0x14] sm:$0xf]
  %v65 = vld [vmem:[%s58 + $0x18] sm:$0xf]
  %v66 = vld [vmem:[%s58 + $0x1c] sm:$0xf]
  %v67 = vld [vmem:[%s58 + $0x20] sm:$0xf]
  %v68 = vld [vmem:[%s58 + $0x24] sm:$0xf]
  %v69 = vld [vmem:[%s58 + $0x28] sm:$0xf]
  %v70 = vld [vmem:[%s58 + $0x2c] sm:$0xf]
  %v71 = vld [vmem:[%s58 + $0x30] sm:$0xf]
  %v72 = vld [vmem:[%s58 + $0x34] sm:$0xf]
  %v73 = vld [vmem:[%s58 + $0x38] sm:$0xf]
  %v74 = vld [vmem:[%s58 + $0x3c] sm:$0xf]
  %v75 = vld [vmem:[%s58 + $0x40] sm:$0xf]
  %v76 = vld [vmem:[%s58 + $0x44] sm:$0xf]
  %v77 = vld [vmem:[%s58 + $0x48] sm:$0xf]
  %v78 = vld [vmem:[%s58 + $0x4c] sm:$0xf]
  %v79 = vld [vmem:[%s58 + $0x50] sm:$0xf]
  %v80 = vld [vmem:[%s58 + $0x54] sm:$0xf]
  %v81 = vld [vmem:[%s58 + $0x58] sm:$0xf]
  %v82 = vld [vmem:[%s58 + $0x5c] sm:$0xf]
  %v83 = vld [vmem:[%s58 + $0x60] sm:$0xf]
  %v84 = vld [vmem:[%s58 + $0x64] sm:$0xf]
  %v85 = vld [vmem:[%s58 + $0x68] sm:$0xf]
  %v86 = vld [vmem:[%s58 + $0x6c] sm:$0xf]
  %v87 = vld [vmem:[%s58 + $0x70] sm:$0xf]
  %v88 = vld [vmem:[%s58 + $0x74] sm:$0xf]
  %v89 = vld [vmem:[%s58 + $0x78] sm:$0xf]
  %v90 = vld [vmem:[%s58 + $0x7c] sm:$0xf]
  %v91 = vld [vmem:[%s2] sm:$0xf]
  %v92 = vld [vmem:[%s2 + $0x4] sm:$0xf]
  %v93 = vld [vmem:[%s2 + $0x8] sm:$0xf]
  %v94 = vld [vmem:[%s2 + $0xc] sm:$0xf]
  %v95 = vld [vmem:[%s2 + $0x10] sm:$0xf]
  %v96 = vld [vmem:[%s2 + $0x14] sm:$0xf]
  %v97 = vld [vmem:[%s2 + $0x18] sm:$0xf]
  %v98 = vld [vmem:[%s2 + $0x1c] sm:$0xf]
  %v99 = vld [vmem:[%s2 + $0x20] sm:$0xf]
  %v100 = vld [vmem:[%s2 + $0x24] sm:$0xf]
  %v101 = vld [vmem:[%s2 + $0x28] sm:$0xf]
  %v102 = vld [vmem:[%s2 + $0x2c] sm:$0xf]
  %v103 = vld [vmem:[%s2 + $0x30] sm:$0xf]
  %v104 = vld [vmem:[%s2 + $0x34] sm:$0xf]
  %v105 = vld [vmem:[%s2 + $0x38] sm:$0xf]
  %v106 = vld [vmem:[%s2 + $0x3c] sm:$0xf]
  %v139 = vunpack.c.l.b16 %v59
  %v140 = vunpack.c.l.b16 %v60
  %v141 = vunpack.c.l.b16 %v61
  %v142 = vunpack.c.l.b16 %v62
  %v143 = vunpack.c.l.b16 %v63
  %v144 = vunpack.c.l.b16 %v64
  %v145 = vunpack.c.l.b16 %v65
  %v146 = vunpack.c.l.b16 %v66
  %v147 = vunpack.c.l.b16 %v67
  %v148 = vunpack.c.l.b16 %v68
  %v149 = vunpack.c.l.b16 %v69
  %v150 = vunpack.c.l.b16 %v70
  %v151 = vunpack.c.l.b16 %v71
  %v152 = vunpack.c.l.b16 %v72
  %v153 = vunpack.c.l.b16 %v73
  %v154 = vunpack.c.l.b16 %v74
  %v155 = vunpack.c.l.b16 %v75
  %v156 = vunpack.c.l.b16 %v76
  %v157 = vunpack.c.l.b16 %v77
  %v158 = vunpack.c.l.b16 %v78
  %v159 = vunpack.c.l.b16 %v79
  %v160 = vunpack.c.l.b16 %v80
  %v161 = vunpack.c.l.b16 %v81
  %v162 = vunpack.c.l.b16 %v82
  %v163 = vunpack.c.l.b16 %v83
  %v164 = vunpack.c.l.b16 %v84
  %v165 = vunpack.c.l.b16 %v85
  %v166 = vunpack.c.l.b16 %v86
  %v167 = vunpack.c.l.b16 %v87
  %v168 = vunpack.c.l.b16 %v88
  %v169 = vunpack.c.l.b16 %v89
  %v170 = vunpack.c.l.b16 %v90
  %v171 = vpack.c.b16 %v140, %v139
  %v172 = vpack.c.b16 %v142, %v141
  %v173 = vpack.c.b16 %v144, %v143
  %v174 = vpack.c.b16 %v146, %v145
  %v175 = vpack.c.b16 %v148, %v147
  %v176 = vpack.c.b16 %v150, %v149
  %v177 = vpack.c.b16 %v152, %v151
  %v178 = vpack.c.b16 %v154, %v153
  %v179 = vpack.c.b16 %v156, %v155
  %v180 = vpack.c.b16 %v158, %v157
  %v181 = vpack.c.b16 %v160, %v159
  %v182 = vpack.c.b16 %v162, %v161
  %v183 = vpack.c.b16 %v164, %v163
  %v184 = vpack.c.b16 %v166, %v165
  %v185 = vpack.c.b16 %v168, %v167
  %v186 = vpack.c.b16 %v170, %v169
  %v219 = vunpack.c.l.b16 %v91
  %v220 = vunpack.c.l.b16 %v92
  %v221 = vunpack.c.l.b16 %v93
  %v222 = vunpack.c.l.b16 %v94
  %v223 = vunpack.c.l.b16 %v95
  %v224 = vunpack.c.l.b16 %v96
  %v225 = vunpack.c.l.b16 %v97
  %v226 = vunpack.c.l.b16 %v98
  %v227 = vunpack.c.l.b16 %v99
  %v228 = vunpack.c.l.b16 %v100
  %v229 = vunpack.c.l.b16 %v101
  %v230 = vunpack.c.l.b16 %v102
  %v231 = vunpack.c.l.b16 %v103
  %v232 = vunpack.c.l.b16 %v104
  %v233 = vunpack.c.l.b16 %v105
  %v234 = vunpack.c.l.b16 %v106
  %v235 = vpack.c.b16 %v220, %v219
  %v236 = vpack.c.b16 %v222, %v221
  %v237 = vpack.c.b16 %v224, %v223
  %v238 = vpack.c.b16 %v226, %v225
  %v239 = vpack.c.b16 %v228, %v227
  %v240 = vpack.c.b16 %v230, %v229
  %v241 = vpack.c.b16 %v232, %v231
  %v242 = vpack.c.b16 %v234, %v233
  %251 = vmatprep.subr.bf16.mxu0 0
  %252 = vmatpush1.bf16.msra.mxu0 %v235
  %253 = vmatprep.subr.bf16.mxu0 0
  %254 = vmatpush1.bf16.msra.mxu0 %v236
  %255 = vmatprep.subr.bf16.mxu0 0
  %256 = vmatpush1.bf16.msra.mxu0 %v237
  %257 = vmatprep.subr.bf16.mxu0 0
  %258 = vmatpush1.bf16.msra.mxu0 %v238
  %259 = vmatprep.subr.bf16.mxu0 0
  %260 = vmatpush1.bf16.msra.mxu0 %v239
  %261 = vmatprep.subr.bf16.mxu0 0
  %262 = vmatpush1.bf16.msra.mxu0 %v240
  %263 = vmatprep.subr.bf16.mxu0 0
  %264 = vmatpush1.bf16.msra.mxu0 %v241
  %265 = vmatprep.subr.bf16.mxu0 0
  %266 = vmatpush1.bf16.msra.mxu0 %v242
  %267 = vmatprep.subr.bf16.mxu0 0
  %268 = vmatpush1.bf16.msra.mxu0 0
  %269 = vmatprep.subr.bf16.mxu0 0
  %270 = vmatpush1.bf16.msra.mxu0 0
  %271 = vmatprep.subr.bf16.mxu0 0
  %272 = vmatpush1.bf16.msra.mxu0 0
  %273 = vmatprep.subr.bf16.mxu0 0
  %274 = vmatpush1.bf16.msra.mxu0 0
  %275 = vmatprep.subr.bf16.mxu0 0
  %276 = vmatpush1.bf16.msra.mxu0 0
  %277 = vmatprep.subr.bf16.mxu0 0
  %278 = vmatpush1.bf16.msra.mxu0 0
  %279 = vmatprep.subr.bf16.mxu0 0
  %280 = vmatpush1.bf16.msra.mxu0 0
  %281 = vmatprep.subr.bf16.mxu0 0
  %282 = vmatpush1.bf16.msra.mxu0 0
  %283 = vmatprep.mubr.bf16.mxu0 0
  %284 = vmatmul.mubr.bf16.gmra.mrb[0].mxu0 %v171
  %v285 = vpop.f32.mrb[0].mxu0
  %v286 = vadd.f32 0.0, %v285
  %v287 = vpop.f32.mrb[0].mxu0
  %v288 = vpop.f32.mrb[0].mxu0
  %v289 = vadd.f32 0.0, %v288
  %v290 = vpop.f32.mrb[0].mxu0
  %291 = vmatprep.mubr.bf16.mxu0 0
  %292 = vmatmul.mubr.bf16.gmra.mrb[0].mxu0 %v172
  %v293 = vpop.f32.mrb[0].mxu0
  %v294 = vadd.f32 0.0, %v293
  %v295 = vpop.f32.mrb[0].mxu0
  %v296 = vpop.f32.mrb[0].mxu0
  %v297 = vadd.f32 0.0, %v296
  %v298 = vpop.f32.mrb[0].mxu0
  %299 = vmatprep.mubr.bf16.mxu0 0
  %300 = vmatmul.mubr.bf16.gmra.mrb[0].mxu0 %v173
  %v301 = vpop.f32.mrb[0].mxu0
  %v302 = vadd.f32 0.0, %v301
  %v303 = vpop.f32.mrb[0].mxu0
  %v304 = vpop.f32.mrb[0].mxu0
  %v305 = vadd.f32 0.0, %v304
  %v306 = vpop.f32.mrb[0].mxu0
  %307 = vmatprep.mubr.bf16.mxu0 0
  %308 = vmatmul.mubr.bf16.gmra.mrb[0].mxu0 %v174
  %v309 = vpop.f32.mrb[0].mxu0
  %v310 = vadd.f32 0.0, %v309
  %v311 = vpop.f32.mrb[0].mxu0
  %v312 = vpop.f32.mrb[0].mxu0
  %v313 = vadd.f32 0.0, %v312
  %v314 = vpop.f32.mrb[0].mxu0
  %315 = vmatprep.mubr.bf16.mxu0 0
  %316 = vmatmul.mubr.bf16.gmra.mrb[0].mxu0 %v175
  %v317 = vpop.f32.mrb[0].mxu0
  %v318 = vadd.f32 0.0, %v317
  %v319 = vpop.f32.mrb[0].mxu0
  %v320 = vpop.f32.mrb[0].mxu0
  %v321 = vadd.f32 0.0, %v320
  %v322 = vpop.f32.mrb[0].mxu0
  %323 = vmatprep.mubr.bf16.mxu0 0
  %324 = vmatmul.mubr.bf16.gmra.mrb[0].mxu0 %v176
  %v325 = vpop.f32.mrb[0].mxu0
  %v326 = vadd.f32 0.0, %v325
  %v327 = vpop.f32.mrb[0].mxu0
  %v328 = vpop.f32.mrb[0].mxu0
  %v329 = vadd.f32 0.0, %v328
  %v330 = vpop.f32.mrb[0].mxu0
  %331 = vmatprep.mubr.bf16.mxu0 0
  %332 = vmatmul.mubr.bf16.gmra.mrb[0].mxu0 %v177
  %v333 = vpop.f32.mrb[0].mxu0
  %v334 = vadd.f32 0.0, %v333
  %v335 = vpop.f32.mrb[0].mxu0
  %v336 = vpop.f32.mrb[0].mxu0
  %v337 = vadd.f32 0.0, %v336
  %v338 = vpop.f32.mrb[0].mxu0
  %339 = vmatprep.mubr.bf16.mxu0 0
  %340 = vmatmul.mubr.bf16.gmra.mrb[0].mxu0 %v178
  %v341 = vpop.f32.mrb[0].mxu0
  %v342 = vadd.f32 0.0, %v341
  %v343 = vpop.f32.mrb[0].mxu0
  %v344 = vpop.f32.mrb[0].mxu0
  %v345 = vadd.f32 0.0, %v344
  %v346 = vpop.f32.mrb[0].mxu0
  %347 = vmatprep.mubr.bf16.mxu0 0
  %348 = vmatmul.mubr.bf16.gmra.mrb[0].mxu0 %v179
  %v349 = vpop.f32.mrb[0].mxu0
  %v350 = vadd.f32 0.0, %v349
  %v351 = vpop.f32.mrb[0].mxu0
  %v352 = vpop.f32.mrb[0].mxu0
  %v353 = vadd.f32 0.0, %v352
  %v354 = vpop.f32.mrb[0].mxu0
  %355 = vmatprep.mubr.bf16.mxu0 0
  %356 = vmatmul.mubr.bf16.gmra.mrb[0].mxu0 %v180
  %v357 = vpop.f32.mrb[0].mxu0
  %v358 = vadd.f32 0.0, %v357
  %v359 = vpop.f32.mrb[0].mxu0
  %v360 = vpop.f32.mrb[0].mxu0
  %v361 = vadd.f32 0.0, %v360
  %v362 = vpop.f32.mrb[0].mxu0
  %363 = vmatprep.mubr.bf16.mxu0 0
  %364 = vmatmul.mubr.bf16.gmra.mrb[0].mxu0 %v181
  %v365 = vpop.f32.mrb[0].mxu0
  %v366 = vadd.f32 0.0, %v365
  %v367 = vpop.f32.mrb[0].mxu0
  %v368 = vpop.f32.mrb[0].mxu0
  %v369 = vadd.f32 0.0, %v368
  %v370 = vpop.f32.mrb[0].mxu0
  %371 = vmatprep.mubr.bf16.mxu0 0
  %372 = vmatmul.mubr.bf16.gmra.mrb[0].mxu0 %v182
  %v373 = vpop.f32.mrb[0].mxu0
  %v374 = vadd.f32 0.0, %v373
  %v375 = vpop.f32.mrb[0].mxu0
  %v376 = vpop.f32.mrb[0].mxu0
  %v377 = vadd.f32 0.0, %v376
  %v378 = vpop.f32.mrb[0].mxu0
  %379 = vmatprep.mubr.bf16.mxu0 0
  %380 = vmatmul.mubr.bf16.gmra.mrb[0].mxu0 %v183
  %v381 = vpop.f32.mrb[0].mxu0
  %v382 = vadd.f32 0.0, %v381
  %v383 = vpop.f32.mrb[0].mxu0
  %v384 = vpop.f32.mrb[0].mxu0
  %v385 = vadd.f32 0.0, %v384
  %v386 = vpop.f32.mrb[0].mxu0
  %387 = vmatprep.mubr.bf16.mxu0 0
  %388 = vmatmul.mubr.bf16.gmra.mrb[0].mxu0 %v184
  %v389 = vpop.f32.mrb[0].mxu0
  %v390 = vadd.f32 0.0, %v389
  %v391 = vpop.f32.mrb[0].mxu0
  %v392 = vpop.f32.mrb[0].mxu0
  %v393 = vadd.f32 0.0, %v392
  %v394 = vpop.f32.mrb[0].mxu0
  %395 = vmatprep.mubr.bf16.mxu0 0
  %396 = vmatmul.mubr.bf16.gmra.mrb[0].mxu0 %v185
  %v397 = vpop.f32.mrb[0].mxu0
  %v398 = vadd.f32 0.0, %v397
  %v399 = vpop.f32.mrb[0].mxu0
  %v400 = vpop.f32.mrb[0].mxu0
  %v401 = vadd.f32 0.0, %v400
  %v402 = vpop.f32.mrb[0].mxu0
  %403 = vmatprep.mubr.bf16.mxu0 0
  %404 = vmatmul.mubr.bf16.gmra.mrb[0].mxu0 %v186
  %v405 = vpop.f32.mrb[0].mxu0
  %v406 = vadd.f32 0.0, %v405
  %v407 = vpop.f32.mrb[0].mxu0
  %v408 = vpop.f32.mrb[0].mxu0
  %v409 = vadd.f32 0.0, %v408
  %v410 = vpop.f32.mrb[0].mxu0
  %411 = vdwg.mxu0
  %v412 = vpack.c.bf16 %v289, %v286
  %v413 = vpack.c.bf16 %v297, %v294
  %v414 = vpack.c.bf16 %v305, %v302
  %v415 = vpack.c.bf16 %v313, %v310
  %v416 = vpack.c.bf16 %v321, %v318
  %v417 = vpack.c.bf16 %v329, %v326
  %v418 = vpack.c.bf16 %v337, %v334
  %v419 = vpack.c.bf16 %v345, %v342
  %v420 = vpack.c.bf16 %v353, %v350
  %v421 = vpack.c.bf16 %v361, %v358
  %v422 = vpack.c.bf16 %v369, %v366
  %v423 = vpack.c.bf16 %v377, %v374
  %v424 = vpack.c.bf16 %v385, %v382
  %v425 = vpack.c.bf16 %v393, %v390
  %v426 = vpack.c.bf16 %v401, %v398
  %v427 = vpack.c.bf16 %v409, %v406
  %v428 = vld [vmem:[#allocation2] sm:$0xff]
  %v429 = vld [vmem:[#allocation2 + $0x8] sm:$0xff]
  %v430 = vld [vmem:[#allocation2 + $0x10] sm:$0xff]
  %v431 = vld [vmem:[#allocation2 + $0x18] sm:$0xff]
  %v432 = vld [vmem:[#allocation2 + $0x20] sm:$0xff]
  %v433 = vld [vmem:[#allocation2 + $0x28] sm:$0xff]
  %v434 = vld [vmem:[#allocation2 + $0x30] sm:$0xff]
  %v435 = vld [vmem:[#allocation2 + $0x38] sm:$0xff]
  %v436 = vld [vmem:[#allocation2 + $0x40] sm:$0xff]
  %v437 = vld [vmem:[#allocation2 + $0x48] sm:$0xff]
  %v438 = vld [vmem:[#allocation2 + $0x50] sm:$0xff]
  %v439 = vld [vmem:[#allocation2 + $0x58] sm:$0xff]
  %v440 = vld [vmem:[#allocation2 + $0x60] sm:$0xff]
  %v441 = vld [vmem:[#allocation2 + $0x68] sm:$0xff]
  %v442 = vld [vmem:[#allocation2 + $0x70] sm:$0xff]
  %v443 = vld [vmem:[#allocation2 + $0x78] sm:$0xff]
  %v444 = vld [vmem:[#allocation2 + $0x80] sm:$0xff]
  %v445 = vld [vmem:[#allocation2 + $0x88] sm:$0xff]
  %v446 = vld [vmem:[#allocation2 + $0x90] sm:$0xff]
  %v447 = vld [vmem:[#allocation2 + $0x98] sm:$0xff]
  %v448 = vld [vmem:[#allocation2 + $0xa0] sm:$0xff]
  %v449 = vld [vmem:[#allocation2 + $0xa8] sm:$0xff]
  %v450 = vld [vmem:[#allocation2 + $0xb0] sm:$0xff]
  %v451 = vld [vmem:[#allocation2 + $0xb8] sm:$0xff]
  %v452 = vld [vmem:[#allocation2 + $0xc0] sm:$0xff]
  %v453 = vld [vmem:[#allocation2 + $0xc8] sm:$0xff]
  %v454 = vld [vmem:[#allocation2 + $0xd0] sm:$0xff]
  %v455 = vld [vmem:[#allocation2 + $0xd8] sm:$0xff]
  %v456 = vld [vmem:[#allocation2 + $0xe0] sm:$0xff]
  %v457 = vld [vmem:[#allocation2 + $0xe8] sm:$0xff]
  %v458 = vld [vmem:[#allocation2 + $0xf0] sm:$0xff]
  %v459 = vld [vmem:[#allocation2 + $0xf8] sm:$0xff]
  %v460 = vld [vmem:[%s0] sm:$0xff]
  %v461 = vld [vmem:[%s0 + $0x8] sm:$0xff]
  %v462 = vld [vmem:[%s0 + $0x10] sm:$0xff]
  %v463 = vld [vmem:[%s0 + $0x18] sm:$0xff]
  %v464 = vld [vmem:[%s0 + $0x20] sm:$0xff]
  %v465 = vld [vmem:[%s0 + $0x28] sm:$0xff]
  %v466 = vld [vmem:[%s0 + $0x30] sm:$0xff]
  %v467 = vld [vmem:[%s0 + $0x38] sm:$0xff]
  %v468 = vld [vmem:[%s0 + $0x40] sm:$0xff]
  %v469 = vld [vmem:[%s0 + $0x48] sm:$0xff]
  %v470 = vld [vmem:[%s0 + $0x50] sm:$0xff]
  %v471 = vld [vmem:[%s0 + $0x58] sm:$0xff]
  %v472 = vld [vmem:[%s0 + $0x60] sm:$0xff]
  %v473 = vld [vmem:[%s0 + $0x68] sm:$0xff]
  %v474 = vld [vmem:[%s0 + $0x70] sm:$0xff]
  %v475 = vld [vmem:[%s0 + $0x78] sm:$0xff]
  %v476 = vld [vmem:[%s0 + $0x80] sm:$0xff]
  %v477 = vld [vmem:[%s0 + $0x88] sm:$0xff]
  %v478 = vld [vmem:[%s0 + $0x90] sm:$0xff]
  %v479 = vld [vmem:[%s0 + $0x98] sm:$0xff]
  %v480 = vld [vmem:[%s0 + $0xa0] sm:$0xff]
  %v481 = vld [vmem:[%s0 + $0xa8] sm:$0xff]
  %v482 = vld [vmem:[%s0 + $0xb0] sm:$0xff]
  %v483 = vld [vmem:[%s0 + $0xb8] sm:$0xff]
  %v484 = vld [vmem:[%s0 + $0xc0] sm:$0xff]
  %v485 = vld [vmem:[%s0 + $0xc8] sm:$0xff]
  %v486 = vld [vmem:[%s0 + $0xd0] sm:$0xff]
  %v487 = vld [vmem:[%s0 + $0xd8] sm:$0xff]
  %v488 = vld [vmem:[%s0 + $0xe0] sm:$0xff]
  %v489 = vld [vmem:[%s0 + $0xe8] sm:$0xff]
  %v490 = vld [vmem:[%s0 + $0xf0] sm:$0xff]
  %v491 = vld [vmem:[%s0 + $0xf8] sm:$0xff]
  %v524 = vunpack.c.l.b16 %v460
  %v525 = vunpack.c.h.b16 %v460
  %v526 = vunpack.c.l.b16 %v461
  %v527 = vunpack.c.h.b16 %v461
  %v528 = vunpack.c.l.b16 %v462
  %v529 = vunpack.c.h.b16 %v462
  %v530 = vunpack.c.l.b16 %v463
  %v531 = vunpack.c.h.b16 %v463
  %v532 = vunpack.c.l.b16 %v464
  %v533 = vunpack.c.h.b16 %v464
  %v534 = vunpack.c.l.b16 %v465
  %v535 = vunpack.c.h.b16 %v465
  %v536 = vunpack.c.l.b16 %v466
  %v537 = vunpack.c.h.b16 %v466
  %v538 = vunpack.c.l.b16 %v467
  %v539 = vunpack.c.h.b16 %v467
  %v540 = vunpack.c.l.b16 %v468
  %v541 = vunpack.c.h.b16 %v468
  %v542 = vunpack.c.l.b16 %v469
  %v543 = vunpack.c.h.b16 %v469
  %v544 = vunpack.c.l.b16 %v470
  %v545 = vunpack.c.h.b16 %v470
  %v546 = vunpack.c.l.b16 %v471
  %v547 = vunpack.c.h.b16 %v471
  %v548 = vunpack.c.l.b16 %v472
  %v549 = vunpack.c.h.b16 %v472
  %v550 = vunpack.c.l.b16 %v473
  %v551 = vunpack.c.h.b16 %v473
  %v552 = vunpack.c.l.b16 %v474
  %v553 = vunpack.c.h.b16 %v474
  %v554 = vunpack.c.l.b16 %v475
  %v555 = vunpack.c.h.b16 %v475
  %v556 = vunpack.c.l.b16 %v476
  %v557 = vunpack.c.h.b16 %v476
  %v558 = vunpack.c.l.b16 %v477
  %v559 = vunpack.c.h.b16 %v477
  %v560 = vunpack.c.l.b16 %v478
  %v561 = vunpack.c.h.b16 %v478
  %v562 = vunpack.c.l.b16 %v479
  %v563 = vunpack.c.h.b16 %v479
  %v564 = vunpack.c.l.b16 %v480
  %v565 = vunpack.c.h.b16 %v480
  %v566 = vunpack.c.l.b16 %v481
  %v567 = vunpack.c.h.b16 %v481
  %v568 = vunpack.c.l.b16 %v482
  %v569 = vunpack.c.h.b16 %v482
  %v570 = vunpack.c.l.b16 %v483
  %v571 = vunpack.c.h.b16 %v483
  %v572 = vunpack.c.l.b16 %v484
  %v573 = vunpack.c.h.b16 %v484
  %v574 = vunpack.c.l.b16 %v485
  %v575 = vunpack.c.h.b16 %v485
  %v576 = vunpack.c.l.b16 %v486
  %v577 = vunpack.c.h.b16 %v486
  %v578 = vunpack.c.l.b16 %v487
  %v579 = vunpack.c.h.b16 %v487
  %v580 = vunpack.c.l.b16 %v488
  %v581 = vunpack.c.h.b16 %v488
  %v582 = vunpack.c.l.b16 %v489
  %v583 = vunpack.c.h.b16 %v489
  %v584 = vunpack.c.l.b16 %v490
  %v585 = vunpack.c.h.b16 %v490
  %v586 = vunpack.c.l.b16 %v491
  %v587 = vunpack.c.h.b16 %v491
  %v588 = vpack.c.b16 %v526, %v524
  %v589 = vpack.c.b16 %v527, %v525
  %v590 = vpack.c.b16 %v530, %v528
  %v591 = vpack.c.b16 %v531, %v529
  %v592 = vpack.c.b16 %v534, %v532
  %v593 = vpack.c.b16 %v535, %v533
  %v594 = vpack.c.b16 %v538, %v536
  %v595 = vpack.c.b16 %v539, %v537
  %v596 = vpack.c.b16 %v542, %v540
  %v597 = vpack.c.b16 %v543, %v541
  %v598 = vpack.c.b16 %v546, %v544
  %v599 = vpack.c.b16 %v547, %v545
  %v600 = vpack.c.b16 %v550, %v548
  %v601 = vpack.c.b16 %v551, %v549
  %v602 = vpack.c.b16 %v554, %v552
  %v603 = vpack.c.b16 %v555, %v553
  %v604 = vpack.c.b16 %v558, %v556
  %v605 = vpack.c.b16 %v559, %v557
  %v606 = vpack.c.b16 %v562, %v560
  %v607 = vpack.c.b16 %v563, %v561
  %v608 = vpack.c.b16 %v566, %v564
  %v609 = vpack.c.b16 %v567, %v565
  %v610 = vpack.c.b16 %v570, %v568
  %v611 = vpack.c.b16 %v571, %v569
  %v612 = vpack.c.b16 %v574, %v572
  %v613 = vpack.c.b16 %v575, %v573
  %v614 = vpack.c.b16 %v578, %v576
  %v615 = vpack.c.b16 %v579, %v577
  %v616 = vpack.c.b16 %v582, %v580
  %v617 = vpack.c.b16 %v583, %v581
  %v618 = vpack.c.b16 %v586, %v584
  %v619 = vpack.c.b16 %v587, %v585
  %652 = vmatprep.subr.bf16.mxu0 0
  %653 = vmatpush1.bf16.msra.mxu0 %v412
  %654 = vmatprep.subr.bf16.mxu0 0
  %655 = vmatpush1.bf16.msra.mxu0 %v413
  %656 = vmatprep.subr.bf16.mxu0 0
  %657 = vmatpush1.bf16.msra.mxu0 %v414
  %658 = vmatprep.subr.bf16.mxu0 0
  %659 = vmatpush1.bf16.msra.mxu0 %v415
  %660 = vmatprep.subr.bf16.mxu0 0
  %661 = vmatpush1.bf16.msra.mxu0 %v416
  %662 = vmatprep.subr.bf16.mxu0 0
  %663 = vmatpush1.bf16.msra.mxu0 %v417
  %664 = vmatprep.subr.bf16.mxu0 0
  %665 = vmatpush1.bf16.msra.mxu0 %v418
  %666 = vmatprep.subr.bf16.mxu0 0
  %667 = vmatpush1.bf16.msra.mxu0 %v419
  %668 = vmatprep.subr.bf16.mxu0 0
  %669 = vmatpush1.bf16.msra.mxu0 %v420
  %670 = vmatprep.subr.bf16.mxu0 0
  %671 = vmatpush1.bf16.msra.mxu0 %v421
  %672 = vmatprep.subr.bf16.mxu0 0
  %673 = vmatpush1.bf16.msra.mxu0 %v422
  %674 = vmatprep.subr.bf16.mxu0 0
  %675 = vmatpush1.bf16.msra.mxu0 %v423
  %676 = vmatprep.subr.bf16.mxu0 0
  %677 = vmatpush1.bf16.msra.mxu0 %v424
  %678 = vmatprep.subr.bf16.mxu0 0
  %679 = vmatpush1.bf16.msra.mxu0 %v425
  %680 = vmatprep.subr.bf16.mxu0 0
  %681 = vmatpush1.bf16.msra.mxu0 %v426
  %682 = vmatprep.subr.bf16.mxu0 0
  %683 = vmatpush1.bf16.msra.mxu0 %v427
  %684 = vmatprep.mubr.bf16.mxu0 %v589
  %685 = vmatmul.mubr.bf16.gmra.mrb[0].mxu0 %v588
  %v686 = vpop.f32.mrb[0].mxu0
  %v687 = vadd.f32 0.0, %v686
  %v688 = vpop.f32.mrb[0].mxu0
  %v689 = vpop.f32.mrb[0].mxu0
  %v690 = vadd.f32 0.0, %v689
  %v691 = vpop.f32.mrb[0].mxu0
  %692 = vmatprep.mubr.bf16.mxu0 %v591
  %693 = vmatmul.mubr.bf16.gmra.mrb[0].mxu0 %v590
  %v694 = vpop.f32.mrb[0].mxu0
  %v695 = vadd.f32 0.0, %v694
  %v696 = vpop.f32.mrb[0].mxu0
  %v697 = vpop.f32.mrb[0].mxu0
  %v698 = vadd.f32 0.0, %v697
  %v699 = vpop.f32.mrb[0].mxu0
  %700 = vmatprep.mubr.bf16.mxu0 %v593
  %701 = vmatmul.mubr.bf16.gmra.mrb[0].mxu0 %v592
  %v702 = vpop.f32.mrb[0].mxu0
  %v703 = vadd.f32 0.0, %v702
  %v704 = vpop.f32.mrb[0].mxu0
  %v705 = vpop.f32.mrb[0].mxu0
  %v706 = vadd.f32 0.0, %v705
  %v707 = vpop.f32.mrb[0].mxu0
  %708 = vmatprep.mubr.bf16.mxu0 %v595
  %709 = vmatmul.mubr.bf16.gmra.mrb[0].mxu0 %v594
  %v710 = vpop.f32.mrb[0].mxu0
  %v711 = vadd.f32 0.0, %v710
  %v712 = vpop.f32.mrb[0].mxu0
  %v713 = vpop.f32.mrb[0].mxu0
  %v714 = vadd.f32 0.0, %v713
  %v715 = vpop.f32.mrb[0].mxu0
  %716 = vmatprep.mubr.bf16.mxu0 %v597
  %717 = vmatmul.mubr.bf16.gmra.mrb[0].mxu0 %v596
  %v718 = vpop.f32.mrb[0].mxu0
  %v719 = vadd.f32 0.0, %v718
  %v720 = vpop.f32.mrb[0].mxu0
  %v721 = vpop.f32.mrb[0].mxu0
  %v722 = vadd.f32 0.0, %v721
  %v723 = vpop.f32.mrb[0].mxu0
  %724 = vmatprep.mubr.bf16.mxu0 %v599
  %725 = vmatmul.mubr.bf16.gmra.mrb[0].mxu0 %v598
  %v726 = vpop.f32.mrb[0].mxu0
  %v727 = vadd.f32 0.0, %v726
  %v728 = vpop.f32.mrb[0].mxu0
  %v729 = vpop.f32.mrb[0].mxu0
  %v730 = vadd.f32 0.0, %v729
  %v731 = vpop.f32.mrb[0].mxu0
  %732 = vmatprep.mubr.bf16.mxu0 %v601
  %733 = vmatmul.mubr.bf16.gmra.mrb[0].mxu0 %v600
  %v734 = vpop.f32.mrb[0].mxu0
  %v735 = vadd.f32 0.0, %v734
  %v736 = vpop.f32.mrb[0].mxu0
  %v737 = vpop.f32.mrb[0].mxu0
  %v738 = vadd.f32 0.0, %v737
  %v739 = vpop.f32.mrb[0].mxu0
  %740 = vmatprep.mubr.bf16.mxu0 %v603
  %741 = vmatmul.mubr.bf16.gmra.mrb[0].mxu0 %v602
  %v742 = vpop.f32.mrb[0].mxu0
  %v743 = vadd.f32 0.0, %v742
  %v744 = vpop.f32.mrb[0].mxu0
  %v745 = vpop.f32.mrb[0].mxu0
  %v746 = vadd.f32 0.0, %v745
  %v747 = vpop.f32.mrb[0].mxu0
  %748 = vmatprep.mubr.bf16.mxu0 %v605
  %749 = vmatmul.mubr.bf16.gmra.mrb[0].mxu0 %v604
  %v750 = vpop.f32.mrb[0].mxu0
  %v751 = vadd.f32 0.0, %v750
  %v752 = vpop.f32.mrb[0].mxu0
  %v753 = vpop.f32.mrb[0].mxu0
  %v754 = vadd.f32 0.0, %v753
  %v755 = vpop.f32.mrb[0].mxu0
  %756 = vmatprep.mubr.bf16.mxu0 %v607
  %757 = vmatmul.mubr.bf16.gmra.mrb[0].mxu0 %v606
  %v758 = vpop.f32.mrb[0].mxu0
  %v759 = vadd.f32 0.0, %v758
  %v760 = vpop.f32.mrb[0].mxu0
  %v761 = vpop.f32.mrb[0].mxu0
  %v762 = vadd.f32 0.0, %v761
  %v763 = vpop.f32.mrb[0].mxu0
  %764 = vmatprep.mubr.bf16.mxu0 %v609
  %765 = vmatmul.mubr.bf16.gmra.mrb[0].mxu0 %v608
  %v766 = vpop.f32.mrb[0].mxu0
  %v767 = vadd.f32 0.0, %v766
  %v768 = vpop.f32.mrb[0].mxu0
  %v769 = vpop.f32.mrb[0].mxu0
  %v770 = vadd.f32 0.0, %v769
  %v771 = vpop.f32.mrb[0].mxu0
  %772 = vmatprep.mubr.bf16.mxu0 %v611
  %773 = vmatmul.mubr.bf16.gmra.mrb[0].mxu0 %v610
  %v774 = vpop.f32.mrb[0].mxu0
  %v775 = vadd.f32 0.0, %v774
  %v776 = vpop.f32.mrb[0].mxu0
  %v777 = vpop.f32.mrb[0].mxu0
  %v778 = vadd.f32 0.0, %v777
  %v779 = vpop.f32.mrb[0].mxu0
  %780 = vmatprep.mubr.bf16.mxu0 %v613
  %781 = vmatmul.mubr.bf16.gmra.mrb[0].mxu0 %v612
  %v782 = vpop.f32.mrb[0].mxu0
  %v783 = vadd.f32 0.0, %v782
  %v784 = vpop.f32.mrb[0].mxu0
  %v785 = vpop.f32.mrb[0].mxu0
  %v786 = vadd.f32 0.0, %v785
  %v787 = vpop.f32.mrb[0].mxu0
  %788 = vmatprep.mubr.bf16.mxu0 %v615
  %789 = vmatmul.mubr.bf16.gmra.mrb[0].mxu0 %v614
  %v790 = vpop.f32.mrb[0].mxu0
  %v791 = vadd.f32 0.0, %v790
  %v792 = vpop.f32.mrb[0].mxu0
  %v793 = vpop.f32.mrb[0].mxu0
  %v794 = vadd.f32 0.0, %v793
  %v795 = vpop.f32.mrb[0].mxu0
  %796 = vmatprep.mubr.bf16.mxu0 %v617
  %797 = vmatmul.mubr.bf16.gmra.mrb[0].mxu0 %v616
  %v798 = vpop.f32.mrb[0].mxu0
  %v799 = vadd.f32 0.0, %v798
  %v800 = vpop.f32.mrb[0].mxu0
  %v801 = vpop.f32.mrb[0].mxu0
  %v802 = vadd.f32 0.0, %v801
  %v803 = vpop.f32.mrb[0].mxu0
  %804 = vmatprep.mubr.bf16.mxu0 %v619
  %805 = vmatmul.mubr.bf16.gmra.mrb[0].mxu0 %v618
  %v806 = vpop.f32.mrb[0].mxu0
  %v807 = vadd.f32 0.0, %v806
  %v808 = vpop.f32.mrb[0].mxu0
  %v809 = vpop.f32.mrb[0].mxu0
  %v810 = vadd.f32 0.0, %v809
  %v811 = vpop.f32.mrb[0].mxu0
  %812 = vdwg.mxu0
  %v813 = vadd.f32 %v428, %v687
  %v814 = vadd.f32 %v429, %v690
  %v815 = vadd.f32 %v430, %v695
  %v816 = vadd.f32 %v431, %v698
  %v817 = vadd.f32 %v432, %v703
  %v818 = vadd.f32 %v433, %v706
  %v819 = vadd.f32 %v434, %v711
  %v820 = vadd.f32 %v435, %v714
  %v821 = vadd.f32 %v436, %v719
  %v822 = vadd.f32 %v437, %v722
  %v823 = vadd.f32 %v438, %v727
  %v824 = vadd.f32 %v439, %v730
  %v825 = vadd.f32 %v440, %v735
  %v826 = vadd.f32 %v441, %v738
  %v827 = vadd.f32 %v442, %v743
  %v828 = vadd.f32 %v443, %v746
  %v829 = vadd.f32 %v444, %v751
  %v830 = vadd.f32 %v445, %v754
  %v831 = vadd.f32 %v446, %v759
  %v832 = vadd.f32 %v447, %v762
  %v833 = vadd.f32 %v448, %v767
  %v834 = vadd.f32 %v449, %v770
  %v835 = vadd.f32 %v450, %v775
  %v836 = vadd.f32 %v451, %v778
  %v837 = vadd.f32 %v452, %v783
  %v838 = vadd.f32 %v453, %v786
  %v839 = vadd.f32 %v454, %v791
  %v840 = vadd.f32 %v455, %v794
  %v841 = vadd.f32 %v456, %v799
  %v842 = vadd.f32 %v457, %v802
  %v843 = vadd.f32 %v458, %v807
  %v844 = vadd.f32 %v459, %v810
  %845 = vst [vmem:[#allocation2] sm:$0xff] %v813
  %846 = vst [vmem:[#allocation2 + $0x8] sm:$0xff] %v814
  %847 = vst [vmem:[#allocation2 + $0x10] sm:$0xff] %v815
  %848 = vst [vmem:[#allocation2 + $0x18] sm:$0xff] %v816
  %849 = vst [vmem:[#allocation2 + $0x20] sm:$0xff] %v817
  %850 = vst [vmem:[#allocation2 + $0x28] sm:$0xff] %v818
  %851 = vst [vmem:[#allocation2 + $0x30] sm:$0xff] %v819
  %852 = vst [vmem:[#allocation2 + $0x38] sm:$0xff] %v820
  %853 = vst [vmem:[#allocation2 + $0x40] sm:$0xff] %v821
  %854 = vst [vmem:[#allocation2 + $0x48] sm:$0xff] %v822
  %855 = vst [vmem:[#allocation2 + $0x50] sm:$0xff] %v823
  %856 = vst [vmem:[#allocation2 + $0x58] sm:$0xff] %v824
  %857 = vst [vmem:[#allocation2 + $0x60] sm:$0xff] %v825
  %858 = vst [vmem:[#allocation2 + $0x68] sm:$0xff] %v826
  %859 = vst [vmem:[#allocation2 + $0x70] sm:$0xff] %v827
  %860 = vst [vmem:[#allocation2 + $0x78] sm:$0xff] %v828
  %861 = vst [vmem:[#allocation2 + $0x80] sm:$0xff] %v829
  %862 = vst [vmem:[#allocation2 + $0x88] sm:$0xff] %v830
  %863 = vst [vmem:[#allocation2 + $0x90] sm:$0xff] %v831
  %864 = vst [vmem:[#allocation2 + $0x98] sm:$0xff] %v832
  %865 = vst [vmem:[#allocation2 + $0xa0] sm:$0xff] %v833
  %866 = vst [vmem:[#allocation2 + $0xa8] sm:$0xff] %v834
  %867 = vst [vmem:[#allocation2 + $0xb0] sm:$0xff] %v835
  %868 = vst [vmem:[#allocation2 + $0xb8] sm:$0xff] %v836
  %869 = vst [vmem:[#allocation2 + $0xc0] sm:$0xff] %v837
  %870 = vst [vmem:[#allocation2 + $0xc8] sm:$0xff] %v838
  %871 = vst [vmem:[#allocation2 + $0xd0] sm:$0xff] %v839
  %872 = vst [vmem:[#allocation2 + $0xd8] sm:$0xff] %v840
  %873 = vst [vmem:[#allocation2 + $0xe0] sm:$0xff] %v841
  %874 = vst [vmem:[#allocation2 + $0xe8] sm:$0xff] %v842
  %875 = vst [vmem:[#allocation2 + $0xf0] sm:$0xff] %v843
  %876 = vst [vmem:[#allocation2 + $0xf8] sm:$0xff] %v844
  // Predicated region
  $region22: #{gcn_forward.6} parent=0 // pred_check
    %p877 = pneg %p18
  $region23: #{gcn_forward.6} parent=0 // pred_check_branch
    %879 = sbr.rel (%p877) target = $region25
  $region24: #{gcn_forward.6} parent=0 // pred_region
    %v880 = vld [vmem:[#allocation2] sm:$0xff]
    %v881 = vld [vmem:[#allocation2 + $0x8] sm:$0xff]
    %v882 = vld [vmem:[#allocation2 + $0x10] sm:$0xff]
    %v883 = vld [vmem:[#allocation2 + $0x18] sm:$0xff]
    %v884 = vld [vmem:[#allocation2 + $0x20] sm:$0xff]
    %v885 = vld [vmem:[#allocation2 + $0x28] sm:$0xff]
    %v886 = vld [vmem:[#allocation2 + $0x30] sm:$0xff]
    %v887 = vld [vmem:[#allocation2 + $0x38] sm:$0xff]
    %v888 = vld [vmem:[#allocation2 + $0x40] sm:$0xff]
    %v889 = vld [vmem:[#allocation2 + $0x48] sm:$0xff]
    %v890 = vld [vmem:[#allocation2 + $0x50] sm:$0xff]
    %v891 = vld [vmem:[#allocation2 + $0x58] sm:$0xff]
    %v892 = vld [vmem:[#allocation2 + $0x60] sm:$0xff]
    %v893 = vld [vmem:[#allocation2 + $0x68] sm:$0xff]
    %v894 = vld [vmem:[#allocation2 + $0x70] sm:$0xff]
    %v895 = vld [vmem:[#allocation2 + $0x78] sm:$0xff]
    %v896 = vld [vmem:[#allocation2 + $0x80] sm:$0xff]
    %v897 = vld [vmem:[#allocation2 + $0x88] sm:$0xff]
    %v898 = vld [vmem:[#allocation2 + $0x90] sm:$0xff]
    %v899 = vld [vmem:[#allocation2 + $0x98] sm:$0xff]
    %v900 = vld [vmem:[#allocation2 + $0xa0] sm:$0xff]
    %v901 = vld [vmem:[#allocation2 + $0xa8] sm:$0xff]
    %v902 = vld [vmem:[#allocation2 + $0xb0] sm:$0xff]
    %v903 = vld [vmem:[#allocation2 + $0xb8] sm:$0xff]
    %v904 = vld [vmem:[#allocation2 + $0xc0] sm:$0xff]
    %v905 = vld [vmem:[#allocation2 + $0xc8] sm:$0xff]
    %v906 = vld [vmem:[#allocation2 + $0xd0] sm:$0xff]
    %v907 = vld [vmem:[#allocation2 + $0xd8] sm:$0xff]
    %v908 = vld [vmem:[#allocation2 + $0xe0] sm:$0xff]
    %v909 = vld [vmem:[#allocation2 + $0xe8] sm:$0xff]
    %v910 = vld [vmem:[#allocation2 + $0xf0] sm:$0xff]
    %v911 = vld [vmem:[#allocation2 + $0xf8] sm:$0xff]
    %v912 = vld [vmem:[%s3] sm:$0xff]
    %v913 = vld [vmem:[%s3 + $0x8] sm:$0xff]
    %v914 = vld [vmem:[%s3 + $0x10] sm:$0xff]
    %v915 = vld [vmem:[%s3 + $0x18] sm:$0xff]
    %v916 = vld [vmem:[%s3 + $0x20] sm:$0xff]
    %v917 = vld [vmem:[%s3 + $0x28] sm:$0xff]
    %v918 = vld [vmem:[%s3 + $0x30] sm:$0xff]
    %v919 = vld [vmem:[%s3 + $0x38] sm:$0xff]
    %v920 = vld [vmem:[%s3 + $0x40] sm:$0xff]
    %v921 = vld [vmem:[%s3 + $0x48] sm:$0xff]
    %v922 = vld [vmem:[%s3 + $0x50] sm:$0xff]
    %v923 = vld [vmem:[%s3 + $0x58] sm:$0xff]
    %v924 = vld [vmem:[%s3 + $0x60] sm:$0xff]
    %v925 = vld [vmem:[%s3 + $0x68] sm:$0xff]
    %v926 = vld [vmem:[%s3 + $0x70] sm:$0xff]
    %v927 = vld [vmem:[%s3 + $0x78] sm:$0xff]
    %v928 = vld [vmem:[%s3 + $0x80] sm:$0xff]
    %v929 = vld [vmem:[%s3 + $0x88] sm:$0xff]
    %v930 = vld [vmem:[%s3 + $0x90] sm:$0xff]
    %v931 = vld [vmem:[%s3 + $0x98] sm:$0xff]
    %v932 = vld [vmem:[%s3 + $0xa0] sm:$0xff]
    %v933 = vld [vmem:[%s3 + $0xa8] sm:$0xff]
    %v934 = vld [vmem:[%s3 + $0xb0] sm:$0xff]
    %v935 = vld [vmem:[%s3 + $0xb8] sm:$0xff]
    %v936 = vld [vmem:[%s3 + $0xc0] sm:$0xff]
    %v937 = vld [vmem:[%s3 + $0xc8] sm:$0xff]
    %v938 = vld [vmem:[%s3 + $0xd0] sm:$0xff]
    %v939 = vld [vmem:[%s3 + $0xd8] sm:$0xff]
    %v940 = vld [vmem:[%s3 + $0xe0] sm:$0xff]
    %v941 = vld [vmem:[%s3 + $0xe8] sm:$0xff]
    %v942 = vld [vmem:[%s3 + $0xf0] sm:$0xff]
    %v943 = vld [vmem:[%s3 + $0xf8] sm:$0xff]
    %v944 = vadd.f32 %v880, %v912
    %v945 = vadd.f32 %v881, %v913
    %v946 = vadd.f32 %v882, %v914
    %v947 = vadd.f32 %v883, %v915
    %v948 = vadd.f32 %v884, %v916
    %v949 = vadd.f32 %v885, %v917
    %v950 = vadd.f32 %v886, %v918
    %v951 = vadd.f32 %v887, %v919
    %v952 = vadd.f32 %v888, %v920
    %v953 = vadd.f32 %v889, %v921
    %v954 = vadd.f32 %v890, %v922
    %v955 = vadd.f32 %v891, %v923
    %v956 = vadd.f32 %v892, %v924
    %v957 = vadd.f32 %v893, %v925
    %v958 = vadd.f32 %v894, %v926
    %v959 = vadd.f32 %v895, %v927
    %v960 = vadd.f32 %v896, %v928
    %v961 = vadd.f32 %v897, %v929
    %v962 = vadd.f32 %v898, %v930
    %v963 = vadd.f32 %v899, %v931
    %v964 = vadd.f32 %v900, %v932
    %v965 = vadd.f32 %v901, %v933
    %v966 = vadd.f32 %v902, %v934
    %v967 = vadd.f32 %v903, %v935
    %v968 = vadd.f32 %v904, %v936
    %v969 = vadd.f32 %v905, %v937
    %v970 = vadd.f32 %v906, %v938
    %v971 = vadd.f32 %v907, %v939
    %v972 = vadd.f32 %v908, %v940
    %v973 = vadd.f32 %v909, %v941
    %v974 = vadd.f32 %v910, %v942
    %v975 = vadd.f32 %v911, %v943
    %v976 = vpack.c.bf16 %v945, %v944
    %v977 = vpack.c.bf16 %v947, %v946
    %v978 = vpack.c.bf16 %v949, %v948
    %v979 = vpack.c.bf16 %v951, %v950
    %v980 = vpack.c.bf16 %v953, %v952
    %v981 = vpack.c.bf16 %v955, %v954
    %v982 = vpack.c.bf16 %v957, %v956
    %v983 = vpack.c.bf16 %v959, %v958
    %v984 = vpack.c.bf16 %v961, %v960
    %v985 = vpack.c.bf16 %v963, %v962
    %v986 = vpack.c.bf16 %v965, %v964
    %v987 = vpack.c.bf16 %v967, %v966
    %v988 = vpack.c.bf16 %v969, %v968
    %v989 = vpack.c.bf16 %v971, %v970
    %v990 = vpack.c.bf16 %v973, %v972
    %v991 = vpack.c.bf16 %v975, %v974
    %v1008 = vunpack.c.l.b16 %v976
    %v1009 = vunpack.c.h.b16 %v976
    %v1010 = vunpack.c.l.b16 %v977
    %v1011 = vunpack.c.h.b16 %v977
    %v1012 = vunpack.c.l.b16 %v978
    %v1013 = vunpack.c.h.b16 %v978
    %v1014 = vunpack.c.l.b16 %v979
    %v1015 = vunpack.c.h.b16 %v979
    %v1016 = vunpack.c.l.b16 %v980
    %v1017 = vunpack.c.h.b16 %v980
    %v1018 = vunpack.c.l.b16 %v981
    %v1019 = vunpack.c.h.b16 %v981
    %v1020 = vunpack.c.l.b16 %v982
    %v1021 = vunpack.c.h.b16 %v982
    %v1022 = vunpack.c.l.b16 %v983
    %v1023 = vunpack.c.h.b16 %v983
    %v1024 = vunpack.c.l.b16 %v984
    %v1025 = vunpack.c.h.b16 %v984
    %v1026 = vunpack.c.l.b16 %v985
    %v1027 = vunpack.c.h.b16 %v985
    %v1028 = vunpack.c.l.b16 %v986
    %v1029 = vunpack.c.h.b16 %v986
    %v1030 = vunpack.c.l.b16 %v987
    %v1031 = vunpack.c.h.b16 %v987
    %v1032 = vunpack.c.l.b16 %v988
    %v1033 = vunpack.c.h.b16 %v988
    %v1034 = vunpack.c.l.b16 %v989
    %v1035 = vunpack.c.h.b16 %v989
    %v1036 = vunpack.c.l.b16 %v990
    %v1037 = vunpack.c.h.b16 %v990
    %v1038 = vunpack.c.l.b16 %v991
    %v1039 = vunpack.c.h.b16 %v991
    %v1040 = vpack.c.b16 %v1008, %v1008
    %v1041 = vpack.c.b16 %v1009, %v1009
    %v1042 = vpack.c.b16 %v1010, %v1010
    %v1043 = vpack.c.b16 %v1011, %v1011
    %v1044 = vpack.c.b16 %v1012, %v1012
    %v1045 = vpack.c.b16 %v1013, %v1013
    %v1046 = vpack.c.b16 %v1014, %v1014
    %v1047 = vpack.c.b16 %v1015, %v1015
    %v1048 = vpack.c.b16 %v1016, %v1016
    %v1049 = vpack.c.b16 %v1017, %v1017
    %v1050 = vpack.c.b16 %v1018, %v1018
    %v1051 = vpack.c.b16 %v1019, %v1019
    %v1052 = vpack.c.b16 %v1020, %v1020
    %v1053 = vpack.c.b16 %v1021, %v1021
    %v1054 = vpack.c.b16 %v1022, %v1022
    %v1055 = vpack.c.b16 %v1023, %v1023
    %v1056 = vpack.c.b16 %v1024, %v1024
    %v1057 = vpack.c.b16 %v1025, %v1025
    %v1058 = vpack.c.b16 %v1026, %v1026
    %v1059 = vpack.c.b16 %v1027, %v1027
    %v1060 = vpack.c.b16 %v1028, %v1028
    %v1061 = vpack.c.b16 %v1029, %v1029
    %v1062 = vpack.c.b16 %v1030, %v1030
    %v1063 = vpack.c.b16 %v1031, %v1031
    %v1064 = vpack.c.b16 %v1032, %v1032
    %v1065 = vpack.c.b16 %v1033, %v1033
    %v1066 = vpack.c.b16 %v1034, %v1034
    %v1067 = vpack.c.b16 %v1035, %v1035
    %v1068 = vpack.c.b16 %v1036, %v1036
    %v1069 = vpack.c.b16 %v1037, %v1037
    %v1070 = vpack.c.b16 %v1038, %v1038
    %v1071 = vpack.c.b16 %v1039, %v1039
    %1104 = vst [vmem:[%s4] sm:$0xf] %v1040
    %1105 = vst [vmem:[%s4 + $0x4] sm:$0xf] %v1041
    %1106 = vst [vmem:[%s4 + $0x8] sm:$0xf] %v1042
    %1107 = vst [vmem:[%s4 + $0xc] sm:$0xf] %v1043
    %1108 = vst [vmem:[%s4 + $0x10] sm:$0xf] %v1044
    %1109 = vst [vmem:[%s4 + $0x14] sm:$0xf] %v1045
    %1110 = vst [vmem:[%s4 + $0x18] sm:$0xf] %v1046
    %1111 = vst [vmem:[%s4 + $0x1c] sm:$0xf] %v1047
    %1112 = vst [vmem:[%s4 + $0x20] sm:$0xf] %v1048
    %1113 = vst [vmem:[%s4 + $0x24] sm:$0xf] %v1049
    %1114 = vst [vmem:[%s4 + $0x28] sm:$0xf] %v1050
    %1115 = vst [vmem:[%s4 + $0x2c] sm:$0xf] %v1051
    %1116 = vst [vmem:[%s4 + $0x30] sm:$0xf] %v1052
    %1117 = vst [vmem:[%s4 + $0x34] sm:$0xf] %v1053
    %1118 = vst [vmem:[%s4 + $0x38] sm:$0xf] %v1054
    %1119 = vst [vmem:[%s4 + $0x3c] sm:$0xf] %v1055
    %1120 = vst [vmem:[%s4 + $0x40] sm:$0xf] %v1056
    %1121 = vst [vmem:[%s4 + $0x44] sm:$0xf] %v1057
    %1122 = vst [vmem:[%s4 + $0x48] sm:$0xf] %v1058
    %1123 = vst [vmem:[%s4 + $0x4c] sm:$0xf] %v1059
    %1124 = vst [vmem:[%s4 + $0x50] sm:$0xf] %v1060
    %1125 = vst [vmem:[%s4 + $0x54] sm:$0xf] %v1061
    %1126 = vst [vmem:[%s4 + $0x58] sm:$0xf] %v1062
    %1127 = vst [vmem:[%s4 + $0x5c] sm:$0xf] %v1063
    %1128 = vst [vmem:[%s4 + $0x60] sm:$0xf] %v1064
    %1129 = vst [vmem:[%s4 + $0x64] sm:$0xf] %v1065
    %1130 = vst [vmem:[%s4 + $0x68] sm:$0xf] %v1066
    %1131 = vst [vmem:[%s4 + $0x6c] sm:$0xf] %v1067
    %1132 = vst [vmem:[%s4 + $0x70] sm:$0xf] %v1068
    %1133 = vst [vmem:[%s4 + $0x74] sm:$0xf] %v1069
    %1134 = vst [vmem:[%s4 + $0x78] sm:$0xf] %v1070
    %1135 = vst [vmem:[%s4 + $0x7c] sm:$0xf] %v1071
  $region25: #{gcn_forward.6} parent=0 // pred_fallthru
    _
  // Predicated region
  $region26: #{gcn_forward.6} parent=0 // pred_check
    _
  $region27: #{gcn_forward.6} parent=0 // pred_check_branch
    %1137 = sbr.rel (0) target = $region29
  $region28: #{gcn_forward.6} parent=0 // pred_region
    _
  $region29: #{gcn_forward.6} parent=0 // pred_fallthru
    _
  // Predicated region
  $region30: #{gcn_forward.6} parent=0 // pred_check
    _
  $region31: #{gcn_forward.6} parent=0 // pred_check_branch
    %1139 = sbr.rel (0) target = $region33
  $region32: #{gcn_forward.6} parent=0 // pred_region
    _
  $region33: #{gcn_forward.6} parent=0 // pred_fallthru
    _

// kernel: gcn_forward.4
$region0: #{gcn_forward.4}
  #allocation0 [shape = 'u32[]', space=smem, size = 0x4, offset = 0x4, fixed_abs, tag = 'smem constant byte address 0x4 - core index']
  #allocation1 [shape = 'u32[144,128]{1,0:T(1,128)}', space=vmem, size = 0x12000, scoped, tag = 'internal scratch']
  #allocation2 [shape = 'f32[256,128]{1,0:T(8,128)}', space=vmem, size = 0x20000, scoped, tag = 'scratch operand']
  %s0 = inlined_call_operand.vmem [shape: bf16[256,256], index: 0, kind: input, shape index: {}]
  %s1 = inlined_call_operand.vmem [shape: bf16[256,128], index: 1, kind: input, shape index: {}]
  %s2 = inlined_call_operand.vmem [shape: bf16[128,128], index: 2, kind: input, shape index: {}]
  %s3 = inlined_call_operand.vmem [shape: f32[256,128], index: 3, kind: input, shape index: {}]
  %s4 = inlined_call_operand.vmem [shape: bf16[256,128], index: 4, kind: output, shape index: {}]
  %s5 = sld [smem:[#allocation0]]
  $region34: #{gcn_forward.4} parent=0
    _
  %s7 = ssub.s32 1, %s5
  %s8 = scalar_select 0, %s7, %s5
  // Predicated region
  $region2: #{gcn_forward.4} parent=0 // pred_check
    _
  $region3: #{gcn_forward.4} parent=0 // pred_check_branch
    %10 = sbr.rel (0) target = $region5
  $region4: #{gcn_forward.4} parent=0 // pred_region
    _
  $region5: #{gcn_forward.4} parent=0 // pred_fallthru
    _
  // Predicated region
  $region6: #{gcn_forward.4} parent=0 // pred_check
    _
  $region7: #{gcn_forward.4} parent=0 // pred_check_branch
    %12 = sbr.rel (0) target = $region9
  $region8: #{gcn_forward.4} parent=0 // pred_region
    _
  $region9: #{gcn_forward.4} parent=0 // pred_fallthru
    _
  // Predicated region
  $region10: #{gcn_forward.4} parent=0 // pred_check
    _
  $region11: #{gcn_forward.4} parent=0 // pred_check_branch
    %14 = sbr.rel (0) target = $region13
  $region12: #{gcn_forward.4} parent=0 // pred_region
    _
  $region13: #{gcn_forward.4} parent=0 // pred_fallthru
    _
  // Predicated region
  $region14: #{gcn_forward.4} parent=0 // pred_check
    _
  $region15: #{gcn_forward.4} parent=0 // pred_check_branch
    %16 = sbr.rel (0) target = $region17
  $region16: #{gcn_forward.4} parent=0 // pred_region
    _
  $region17: #{gcn_forward.4} parent=0 // pred_fallthru
    _
  %p18 = scmp.eq.s32.totalorder 0, 0
  // Predicated region
  $region18: #{gcn_forward.4} parent=0 // pred_check
    %p19 = pneg %p18
  $region19: #{gcn_forward.4} parent=0 // pred_check_branch
    %21 = sbr.rel (%p19) target = $region21
  $region20: #{gcn_forward.4} parent=0 // pred_region
    %22 = vst [vmem:[#allocation2] sm:$0xff] 0.0
    %23 = vst [vmem:[#allocation2 + $0x8] sm:$0xff] 0.0
    %24 = vst [vmem:[#allocation2 + $0x10] sm:$0xff] 0.0
    %25 = vst [vmem:[#allocation2 + $0x18] sm:$0xff] 0.0
    %26 = vst [vmem:[#allocation2 + $0x20] sm:$0xff] 0.0
    %27 = vst [vmem:[#allocation2 + $0x28] sm:$0xff] 0.0
    %28 = vst [vmem:[#allocation2 + $0x30] sm:$0xff] 0.0
    %29 = vst [vmem:[#allocation2 + $0x38] sm:$0xff] 0.0
    %30 = vst [vmem:[#allocation2 + $0x40] sm:$0xff] 0.0
    %31 = vst [vmem:[#allocation2 + $0x48] sm:$0xff] 0.0
    %32 = vst [vmem:[#allocation2 + $0x50] sm:$0xff] 0.0
    %33 = vst [vmem:[#allocation2 + $0x58] sm:$0xff] 0.0
    %34 = vst [vmem:[#allocation2 + $0x60] sm:$0xff] 0.0
    %35 = vst [vmem:[#allocation2 + $0x68] sm:$0xff] 0.0
    %36 = vst [vmem:[#allocation2 + $0x70] sm:$0xff] 0.0
    %37 = vst [vmem:[#allocation2 + $0x78] sm:$0xff] 0.0
    %38 = vst [vmem:[#allocation2 + $0x80] sm:$0xff] 0.0
    %39 = vst [vmem:[#allocation2 + $0x88] sm:$0xff] 0.0
    %40 = vst [vmem:[#allocation2 + $0x90] sm:$0xff] 0.0
    %41 = vst [vmem:[#allocation2 + $0x98] sm:$0xff] 0.0
    %42 = vst [vmem:[#allocation2 + $0xa0] sm:$0xff] 0.0
    %43 = vst [vmem:[#allocation2 + $0xa8] sm:$0xff] 0.0
    %44 = vst [vmem:[#allocation2 + $0xb0] sm:$0xff] 0.0
    %45 = vst [vmem:[#allocation2 + $0xb8] sm:$0xff] 0.0
    %46 = vst [vmem:[#allocation2 + $0xc0] sm:$0xff] 0.0
    %47 = vst [vmem:[#allocation2 + $0xc8] sm:$0xff] 0.0
    %48 = vst [vmem:[#allocation2 + $0xd0] sm:$0xff] 0.0
    %49 = vst [vmem:[#allocation2 + $0xd8] sm:$0xff] 0.0
    %50 = vst [vmem:[#allocation2 + $0xe0] sm:$0xff] 0.0
    %51 = vst [vmem:[#allocation2 + $0xe8] sm:$0xff] 0.0
    %52 = vst [vmem:[#allocation2 + $0xf0] sm:$0xff] 0.0
    %53 = vst [vmem:[#allocation2 + $0xf8] sm:$0xff] 0.0
  $region21: #{gcn_forward.4} parent=0 // pred_fallthru
    _
  %s54 = smul.u32 0, 256
  %s55 = sshra.s32 %s54, 3
  %s56 = sand.u32 %s54, 7
  %s57 = smul.addr %s55, 4
  %s58 = scalar_lea.vmem %s1, %s57
  %v59 = vld [vmem:[%s58] sm:$0xf]
  %v60 = vld [vmem:[%s58 + $0x4] sm:$0xf]
  %v61 = vld [vmem:[%s58 + $0x8] sm:$0xf]
  %v62 = vld [vmem:[%s58 + $0xc] sm:$0xf]
  %v63 = vld [vmem:[%s58 + $0x10] sm:$0xf]
  %v64 = vld [vmem:[%s58 + $0x14] sm:$0xf]
  %v65 = vld [vmem:[%s58 + $0x18] sm:$0xf]
  %v66 = vld [vmem:[%s58 + $0x1c] sm:$0xf]
  %v67 = vld [vmem:[%s58 + $0x20] sm:$0xf]
  %v68 = vld [vmem:[%s58 + $0x24] sm:$0xf]
  %v69 = vld [vmem:[%s58 + $0x28] sm:$0xf]
  %v70 = vld [vmem:[%s58 + $0x2c] sm:$0xf]
  %v71 = vld [vmem:[%s58 + $0x30] sm:$0xf]
  %v72 = vld [vmem:[%s58 + $0x34] sm:$0xf]
  %v73 = vld [vmem:[%s58 + $0x38] sm:$0xf]
  %v74 = vld [vmem:[%s58 + $0x3c] sm:$0xf]
  %v75 = vld [vmem:[%s58 + $0x40] sm:$0xf]
  %v76 = vld [vmem:[%s58 + $0x44] sm:$0xf]
  %v77 = vld [vmem:[%s58 + $0x48] sm:$0xf]
  %v78 = vld [vmem:[%s58 + $0x4c] sm:$0xf]
  %v79 = vld [vmem:[%s58 + $0x50] sm:$0xf]
  %v80 = vld [vmem:[%s58 + $0x54] sm:$0xf]
  %v81 = vld [vmem:[%s58 + $0x58] sm:$0xf]
  %v82 = vld [vmem:[%s58 + $0x5c] sm:$0xf]
  %v83 = vld [vmem:[%s58 + $0x60] sm:$0xf]
  %v84 = vld [vmem:[%s58 + $0x64] sm:$0xf]
  %v85 = vld [vmem:[%s58 + $0x68] sm:$0xf]
  %v86 = vld [vmem:[%s58 + $0x6c] sm:$0xf]
  %v87 = vld [vmem:[%s58 + $0x70] sm:$0xf]
  %v88 = vld [vmem:[%s58 + $0x74] sm:$0xf]
  %v89 = vld [vmem:[%s58 + $0x78] sm:$0xf]
  %v90 = vld [vmem:[%s58 + $0x7c] sm:$0xf]
  %v91 = vld [vmem:[%s2] sm:$0xf]
  %v92 = vld [vmem:[%s2 + $0x4] sm:$0xf]
  %v93 = vld [vmem:[%s2 + $0x8] sm:$0xf]
  %v94 = vld [vmem:[%s2 + $0xc] sm:$0xf]
  %v95 = vld [vmem:[%s2 + $0x10] sm:$0xf]
  %v96 = vld [vmem:[%s2 + $0x14] sm:$0xf]
  %v97 = vld [vmem:[%s2 + $0x18] sm:$0xf]
  %v98 = vld [vmem:[%s2 + $0x1c] sm:$0xf]
  %v99 = vld [vmem:[%s2 + $0x20] sm:$0xf]
  %v100 = vld [vmem:[%s2 + $0x24] sm:$0xf]
  %v101 = vld [vmem:[%s2 + $0x28] sm:$0xf]
  %v102 = vld [vmem:[%s2 + $0x2c] sm:$0xf]
  %v103 = vld [vmem:[%s2 + $0x30] sm:$0xf]
  %v104 = vld [vmem:[%s2 + $0x34] sm:$0xf]
  %v105 = vld [vmem:[%s2 + $0x38] sm:$0xf]
  %v106 = vld [vmem:[%s2 + $0x3c] sm:$0xf]
  %v139 = vunpack.c.l.b16 %v59
  %v140 = vunpack.c.l.b16 %v60
  %v141 = vunpack.c.l.b16 %v61
  %v142 = vunpack.c.l.b16 %v62
  %v143 = vunpack.c.l.b16 %v63
  %v144 = vunpack.c.l.b16 %v64
  %v145 = vunpack.c.l.b16 %v65
  %v146 = vunpack.c.l.b16 %v66
  %v147 = vunpack.c.l.b16 %v67
  %v148 = vunpack.c.l.b16 %v68
  %v149 = vunpack.c.l.b16 %v69
  %v150 = vunpack.c.l.b16 %v70
  %v151 = vunpack.c.l.b16 %v71
  %v152 = vunpack.c.l.b16 %v72
  %v153 = vunpack.c.l.b16 %v73
  %v154 = vunpack.c.l.b16 %v74
  %v155 = vunpack.c.l.b16 %v75
  %v156 = vunpack.c.l.b16 %v76
  %v157 = vunpack.c.l.b16 %v77
  %v158 = vunpack.c.l.b16 %v78
  %v159 = vunpack.c.l.b16 %v79
  %v160 = vunpack.c.l.b16 %v80
  %v161 = vunpack.c.l.b16 %v81
  %v162 = vunpack.c.l.b16 %v82
  %v163 = vunpack.c.l.b16 %v83
  %v164 = vunpack.c.l.b16 %v84
  %v165 = vunpack.c.l.b16 %v85
  %v166 = vunpack.c.l.b16 %v86
  %v167 = vunpack.c.l.b16 %v87
  %v168 = vunpack.c.l.b16 %v88
  %v169 = vunpack.c.l.b16 %v89
  %v170 = vunpack.c.l.b16 %v90
  %v171 = vpack.c.b16 %v140, %v139
  %v172 = vpack.c.b16 %v142, %v141
  %v173 = vpack.c.b16 %v144, %v143
  %v174 = vpack.c.b16 %v146, %v145
  %v175 = vpack.c.b16 %v148, %v147
  %v176 = vpack.c.b16 %v150, %v149
  %v177 = vpack.c.b16 %v152, %v151
  %v178 = vpack.c.b16 %v154, %v153
  %v179 = vpack.c.b16 %v156, %v155
  %v180 = vpack.c.b16 %v158, %v157
  %v181 = vpack.c.b16 %v160, %v159
  %v182 = vpack.c.b16 %v162, %v161
  %v183 = vpack.c.b16 %v164, %v163
  %v184 = vpack.c.b16 %v166, %v165
  %v185 = vpack.c.b16 %v168, %v167
  %v186 = vpack.c.b16 %v170, %v169
  %v219 = vunpack.c.l.b16 %v91
  %v220 = vunpack.c.l.b16 %v92
  %v221 = vunpack.c.l.b16 %v93
  %v222 = vunpack.c.l.b16 %v94
  %v223 = vunpack.c.l.b16 %v95
  %v224 = vunpack.c.l.b16 %v96
  %v225 = vunpack.c.l.b16 %v97
  %v226 = vunpack.c.l.b16 %v98
  %v227 = vunpack.c.l.b16 %v99
  %v228 = vunpack.c.l.b16 %v100
  %v229 = vunpack.c.l.b16 %v101
  %v230 = vunpack.c.l.b16 %v102
  %v231 = vunpack.c.l.b16 %v103
  %v232 = vunpack.c.l.b16 %v104
  %v233 = vunpack.c.l.b16 %v105
  %v234 = vunpack.c.l.b16 %v106
  %v235 = vpack.c.b16 %v220, %v219
  %v236 = vpack.c.b16 %v222, %v221
  %v237 = vpack.c.b16 %v224, %v223
  %v238 = vpack.c.b16 %v226, %v225
  %v239 = vpack.c.b16 %v228, %v227
  %v240 = vpack.c.b16 %v230, %v229
  %v241 = vpack.c.b16 %v232, %v231
  %v242 = vpack.c.b16 %v234, %v233
  %251 = vmatprep.subr.bf16.mxu0 0
  %252 = vmatpush1.bf16.msra.mxu0 %v235
  %253 = vmatprep.subr.bf16.mxu0 0
  %254 = vmatpush1.bf16.msra.mxu0 %v236
  %255 = vmatprep.subr.bf16.mxu0 0
  %256 = vmatpush1.bf16.msra.mxu0 %v237
  %257 = vmatprep.subr.bf16.mxu0 0
  %258 = vmatpush1.bf16.msra.mxu0 %v238
  %259 = vmatprep.subr.bf16.mxu0 0
  %260 = vmatpush1.bf16.msra.mxu0 %v239
  %261 = vmatprep.subr.bf16.mxu0 0
  %262 = vmatpush1.bf16.msra.mxu0 %v240
  %263 = vmatprep.subr.bf16.mxu0 0
  %264 = vmatpush1.bf16.msra.mxu0 %v241
  %265 = vmatprep.subr.bf16.mxu0 0
  %266 = vmatpush1.bf16.msra.mxu0 %v242
  %267 = vmatprep.subr.bf16.mxu0 0
  %268 = vmatpush1.bf16.msra.mxu0 0
  %269 = vmatprep.subr.bf16.mxu0 0
  %270 = vmatpush1.bf16.msra.mxu0 0
  %271 = vmatprep.subr.bf16.mxu0 0
  %272 = vmatpush1.bf16.msra.mxu0 0
  %273 = vmatprep.subr.bf16.mxu0 0
  %274 = vmatpush1.bf16.msra.mxu0 0
  %275 = vmatprep.subr.bf16.mxu0 0
  %276 = vmatpush1.bf16.msra.mxu0 0
  %277 = vmatprep.subr.bf16.mxu0 0
  %278 = vmatpush1.bf16.msra.mxu0 0
  %279 = vmatprep.subr.bf16.mxu0 0
  %280 = vmatpush1.bf16.msra.mxu0 0
  %281 = vmatprep.subr.bf16.mxu0 0
  %282 = vmatpush1.bf16.msra.mxu0 0
  %283 = vmatprep.mubr.bf16.mxu0 0
  %284 = vmatmul.mubr.bf16.gmra.mrb[0].mxu0 %v171
  %v285 = vpop.f32.mrb[0].mxu0
  %v286 = vadd.f32 0.0, %v285
  %v287 = vpop.f32.mrb[0].mxu0
  %v288 = vpop.f32.mrb[0].mxu0
  %v289 = vadd.f32 0.0, %v288
  %v290 = vpop.f32.mrb[0].mxu0
  %291 = vmatprep.mubr.bf16.mxu0 0
  %292 = vmatmul.mubr.bf16.gmra.mrb[0].mxu0 %v172
  %v293 = vpop.f32.mrb[0].mxu0
  %v294 = vadd.f32 0.0, %v293
  %v295 = vpop.f32.mrb[0].mxu0
  %v296 = vpop.f32.mrb[0].mxu0
  %v297 = vadd.f32 0.0, %v296
  %v298 = vpop.f32.mrb[0].mxu0
  %299 = vmatprep.mubr.bf16.mxu0 0
  %300 = vmatmul.mubr.bf16.gmra.mrb[0].mxu0 %v173
  %v301 = vpop.f32.mrb[0].mxu0
  %v302 = vadd.f32 0.0, %v301
  %v303 = vpop.f32.mrb[0].mxu0
  %v304 = vpop.f32.mrb[0].mxu0
  %v305 = vadd.f32 0.0, %v304
  %v306 = vpop.f32.mrb[0].mxu0
  %307 = vmatprep.mubr.bf16.mxu0 0
  %308 = vmatmul.mubr.bf16.gmra.mrb[0].mxu0 %v174
  %v309 = vpop.f32.mrb[0].mxu0
  %v310 = vadd.f32 0.0, %v309
  %v311 = vpop.f32.mrb[0].mxu0
  %v312 = vpop.f32.mrb[0].mxu0
  %v313 = vadd.f32 0.0, %v312
  %v314 = vpop.f32.mrb[0].mxu0
  %315 = vmatprep.mubr.bf16.mxu0 0
  %316 = vmatmul.mubr.bf16.gmra.mrb[0].mxu0 %v175
  %v317 = vpop.f32.mrb[0].mxu0
  %v318 = vadd.f32 0.0, %v317
  %v319 = vpop.f32.mrb[0].mxu0
  %v320 = vpop.f32.mrb[0].mxu0
  %v321 = vadd.f32 0.0, %v320
  %v322 = vpop.f32.mrb[0].mxu0
  %323 = vmatprep.mubr.bf16.mxu0 0
  %324 = vmatmul.mubr.bf16.gmra.mrb[0].mxu0 %v176
  %v325 = vpop.f32.mrb[0].mxu0
  %v326 = vadd.f32 0.0, %v325
  %v327 = vpop.f32.mrb[0].mxu0
  %v328 = vpop.f32.mrb[0].mxu0
  %v329 = vadd.f32 0.0, %v328
  %v330 = vpop.f32.mrb[0].mxu0
  %331 = vmatprep.mubr.bf16.mxu0 0
  %332 = vmatmul.mubr.bf16.gmra.mrb[0].mxu0 %v177
  %v333 = vpop.f32.mrb[0].mxu0
  %v334 = vadd.f32 0.0, %v333
  %v335 = vpop.f32.mrb[0].mxu0
  %v336 = vpop.f32.mrb[0].mxu0
  %v337 = vadd.f32 0.0, %v336
  %v338 = vpop.f32.mrb[0].mxu0
  %339 = vmatprep.mubr.bf16.mxu0 0
  %340 = vmatmul.mubr.bf16.gmra.mrb[0].mxu0 %v178
  %v341 = vpop.f32.mrb[0].mxu0
  %v342 = vadd.f32 0.0, %v341
  %v343 = vpop.f32.mrb[0].mxu0
  %v344 = vpop.f32.mrb[0].mxu0
  %v345 = vadd.f32 0.0, %v344
  %v346 = vpop.f32.mrb[0].mxu0
  %347 = vmatprep.mubr.bf16.mxu0 0
  %348 = vmatmul.mubr.bf16.gmra.mrb[0].mxu0 %v179
  %v349 = vpop.f32.mrb[0].mxu0
  %v350 = vadd.f32 0.0, %v349
  %v351 = vpop.f32.mrb[0].mxu0
  %v352 = vpop.f32.mrb[0].mxu0
  %v353 = vadd.f32 0.0, %v352
  %v354 = vpop.f32.mrb[0].mxu0
  %355 = vmatprep.mubr.bf16.mxu0 0
  %356 = vmatmul.mubr.bf16.gmra.mrb[0].mxu0 %v180
  %v357 = vpop.f32.mrb[0].mxu0
  %v358 = vadd.f32 0.0, %v357
  %v359 = vpop.f32.mrb[0].mxu0
  %v360 = vpop.f32.mrb[0].mxu0
  %v361 = vadd.f32 0.0, %v360
  %v362 = vpop.f32.mrb[0].mxu0
  %363 = vmatprep.mubr.bf16.mxu0 0
  %364 = vmatmul.mubr.bf16.gmra.mrb[0].mxu0 %v181
  %v365 = vpop.f32.mrb[0].mxu0
  %v366 = vadd.f32 0.0, %v365
  %v367 = vpop.f32.mrb[0].mxu0
  %v368 = vpop.f32.mrb[0].mxu0
  %v369 = vadd.f32 0.0, %v368
  %v370 = vpop.f32.mrb[0].mxu0
  %371 = vmatprep.mubr.bf16.mxu0 0
  %372 = vmatmul.mubr.bf16.gmra.mrb[0].mxu0 %v182
  %v373 = vpop.f32.mrb[0].mxu0
  %v374 = vadd.f32 0.0, %v373
  %v375 = vpop.f32.mrb[0].mxu0
  %v376 = vpop.f32.mrb[0].mxu0
  %v377 = vadd.f32 0.0, %v376
  %v378 = vpop.f32.mrb[0].mxu0
  %379 = vmatprep.mubr.bf16.mxu0 0
  %380 = vmatmul.mubr.bf16.gmra.mrb[0].mxu0 %v183
  %v381 = vpop.f32.mrb[0].mxu0
  %v382 = vadd.f32 0.0, %v381
  %v383 = vpop.f32.mrb[0].mxu0
  %v384 = vpop.f32.mrb[0].mxu0
  %v385 = vadd.f32 0.0, %v384
  %v386 = vpop.f32.mrb[0].mxu0
  %387 = vmatprep.mubr.bf16.mxu0 0
  %388 = vmatmul.mubr.bf16.gmra.mrb[0].mxu0 %v184
  %v389 = vpop.f32.mrb[0].mxu0
  %v390 = vadd.f32 0.0, %v389
  %v391 = vpop.f32.mrb[0].mxu0
  %v392 = vpop.f32.mrb[0].mxu0
  %v393 = vadd.f32 0.0, %v392
  %v394 = vpop.f32.mrb[0].mxu0
  %395 = vmatprep.mubr.bf16.mxu0 0
  %396 = vmatmul.mubr.bf16.gmra.mrb[0].mxu0 %v185
  %v397 = vpop.f32.mrb[0].mxu0
  %v398 = vadd.f32 0.0, %v397
  %v399 = vpop.f32.mrb[0].mxu0
  %v400 = vpop.f32.mrb[0].mxu0
  %v401 = vadd.f32 0.0, %v400
  %v402 = vpop.f32.mrb[0].mxu0
  %403 = vmatprep.mubr.bf16.mxu0 0
  %404 = vmatmul.mubr.bf16.gmra.mrb[0].mxu0 %v186
  %v405 = vpop.f32.mrb[0].mxu0
  %v406 = vadd.f32 0.0, %v405
  %v407 = vpop.f32.mrb[0].mxu0
  %v408 = vpop.f32.mrb[0].mxu0
  %v409 = vadd.f32 0.0, %v408
  %v410 = vpop.f32.mrb[0].mxu0
  %411 = vdwg.mxu0
  %v412 = vpack.c.bf16 %v289, %v286
  %v413 = vpack.c.bf16 %v297, %v294
  %v414 = vpack.c.bf16 %v305, %v302
  %v415 = vpack.c.bf16 %v313, %v310
  %v416 = vpack.c.bf16 %v321, %v318
  %v417 = vpack.c.bf16 %v329, %v326
  %v418 = vpack.c.bf16 %v337, %v334
  %v419 = vpack.c.bf16 %v345, %v342
  %v420 = vpack.c.bf16 %v353, %v350
  %v421 = vpack.c.bf16 %v361, %v358
  %v422 = vpack.c.bf16 %v369, %v366
  %v423 = vpack.c.bf16 %v377, %v374
  %v424 = vpack.c.bf16 %v385, %v382
  %v425 = vpack.c.bf16 %v393, %v390
  %v426 = vpack.c.bf16 %v401, %v398
  %v427 = vpack.c.bf16 %v409, %v406
  %v428 = vld [vmem:[#allocation2] sm:$0xff]
  %v429 = vld [vmem:[#allocation2 + $0x8] sm:$0xff]
  %v430 = vld [vmem:[#allocation2 + $0x10] sm:$0xff]
  %v431 = vld [vmem:[#allocation2 + $0x18] sm:$0xff]
  %v432 = vld [vmem:[#allocation2 + $0x20] sm:$0xff]
  %v433 = vld [vmem:[#allocation2 + $0x28] sm:$0xff]
  %v434 = vld [vmem:[#allocation2 + $0x30] sm:$0xff]
  %v435 = vld [vmem:[#allocation2 + $0x38] sm:$0xff]
  %v436 = vld [vmem:[#allocation2 + $0x40] sm:$0xff]
  %v437 = vld [vmem:[#allocation2 + $0x48] sm:$0xff]
  %v438 = vld [vmem:[#allocation2 + $0x50] sm:$0xff]
  %v439 = vld [vmem:[#allocation2 + $0x58] sm:$0xff]
  %v440 = vld [vmem:[#allocation2 + $0x60] sm:$0xff]
  %v441 = vld [vmem:[#allocation2 + $0x68] sm:$0xff]
  %v442 = vld [vmem:[#allocation2 + $0x70] sm:$0xff]
  %v443 = vld [vmem:[#allocation2 + $0x78] sm:$0xff]
  %v444 = vld [vmem:[#allocation2 + $0x80] sm:$0xff]
  %v445 = vld [vmem:[#allocation2 + $0x88] sm:$0xff]
  %v446 = vld [vmem:[#allocation2 + $0x90] sm:$0xff]
  %v447 = vld [vmem:[#allocation2 + $0x98] sm:$0xff]
  %v448 = vld [vmem:[#allocation2 + $0xa0] sm:$0xff]
  %v449 = vld [vmem:[#allocation2 + $0xa8] sm:$0xff]
  %v450 = vld [vmem:[#allocation2 + $0xb0] sm:$0xff]
  %v451 = vld [vmem:[#allocation2 + $0xb8] sm:$0xff]
  %v452 = vld [vmem:[#allocation2 + $0xc0] sm:$0xff]
  %v453 = vld [vmem:[#allocation2 + $0xc8] sm:$0xff]
  %v454 = vld [vmem:[#allocation2 + $0xd0] sm:$0xff]
  %v455 = vld [vmem:[#allocation2 + $0xd8] sm:$0xff]
  %v456 = vld [vmem:[#allocation2 + $0xe0] sm:$0xff]
  %v457 = vld [vmem:[#allocation2 + $0xe8] sm:$0xff]
  %v458 = vld [vmem:[#allocation2 + $0xf0] sm:$0xff]
  %v459 = vld [vmem:[#allocation2 + $0xf8] sm:$0xff]
  %v460 = vld [vmem:[%s0] sm:$0xff]
  %v461 = vld [vmem:[%s0 + $0x8] sm:$0xff]
  %v462 = vld [vmem:[%s0 + $0x10] sm:$0xff]
  %v463 = vld [vmem:[%s0 + $0x18] sm:$0xff]
  %v464 = vld [vmem:[%s0 + $0x20] sm:$0xff]
  %v465 = vld [vmem:[%s0 + $0x28] sm:$0xff]
  %v466 = vld [vmem:[%s0 + $0x30] sm:$0xff]
  %v467 = vld [vmem:[%s0 + $0x38] sm:$0xff]
  %v468 = vld [vmem:[%s0 + $0x40] sm:$0xff]
  %v469 = vld [vmem:[%s0 + $0x48] sm:$0xff]
  %v470 = vld [vmem:[%s0 + $0x50] sm:$0xff]
  %v471 = vld [vmem:[%s0 + $0x58] sm:$0xff]
  %v472 = vld [vmem:[%s0 + $0x60] sm:$0xff]
  %v473 = vld [vmem:[%s0 + $0x68] sm:$0xff]
  %v474 = vld [vmem:[%s0 + $0x70] sm:$0xff]
  %v475 = vld [vmem:[%s0 + $0x78] sm:$0xff]
  %v476 = vld [vmem:[%s0 + $0x80] sm:$0xff]
  %v477 = vld [vmem:[%s0 + $0x88] sm:$0xff]
  %v478 = vld [vmem:[%s0 + $0x90] sm:$0xff]
  %v479 = vld [vmem:[%s0 + $0x98] sm:$0xff]
  %v480 = vld [vmem:[%s0 + $0xa0] sm:$0xff]
  %v481 = vld [vmem:[%s0 + $0xa8] sm:$0xff]
  %v482 = vld [vmem:[%s0 + $0xb0] sm:$0xff]
  %v483 = vld [vmem:[%s0 + $0xb8] sm:$0xff]
  %v484 = vld [vmem:[%s0 + $0xc0] sm:$0xff]
  %v485 = vld [vmem:[%s0 + $0xc8] sm:$0xff]
  %v486 = vld [vmem:[%s0 + $0xd0] sm:$0xff]
  %v487 = vld [vmem:[%s0 + $0xd8] sm:$0xff]
  %v488 = vld [vmem:[%s0 + $0xe0] sm:$0xff]
  %v489 = vld [vmem:[%s0 + $0xe8] sm:$0xff]
  %v490 = vld [vmem:[%s0 + $0xf0] sm:$0xff]
  %v491 = vld [vmem:[%s0 + $0xf8] sm:$0xff]
  %v524 = vunpack.c.l.b16 %v460
  %v525 = vunpack.c.h.b16 %v460
  %v526 = vunpack.c.l.b16 %v461
  %v527 = vunpack.c.h.b16 %v461
  %v528 = vunpack.c.l.b16 %v462
  %v529 = vunpack.c.h.b16 %v462
  %v530 = vunpack.c.l.b16 %v463
  %v531 = vunpack.c.h.b16 %v463
  %v532 = vunpack.c.l.b16 %v464
  %v533 = vunpack.c.h.b16 %v464
  %v534 = vunpack.c.l.b16 %v465
  %v535 = vunpack.c.h.b16 %v465
  %v536 = vunpack.c.l.b16 %v466
  %v537 = vunpack.c.h.b16 %v466
  %v538 = vunpack.c.l.b16 %v467
  %v539 = vunpack.c.h.b16 %v467
  %v540 = vunpack.c.l.b16 %v468
  %v541 = vunpack.c.h.b16 %v468
  %v542 = vunpack.c.l.b16 %v469
  %v543 = vunpack.c.h.b16 %v469
  %v544 = vunpack.c.l.b16 %v470
  %v545 = vunpack.c.h.b16 %v470
  %v546 = vunpack.c.l.b16 %v471
  %v547 = vunpack.c.h.b16 %v471
  %v548 = vunpack.c.l.b16 %v472
  %v549 = vunpack.c.h.b16 %v472
  %v550 = vunpack.c.l.b16 %v473
  %v551 = vunpack.c.h.b16 %v473
  %v552 = vunpack.c.l.b16 %v474
  %v553 = vunpack.c.h.b16 %v474
  %v554 = vunpack.c.l.b16 %v475
  %v555 = vunpack.c.h.b16 %v475
  %v556 = vunpack.c.l.b16 %v476
  %v557 = vunpack.c.h.b16 %v476
  %v558 = vunpack.c.l.b16 %v477
  %v559 = vunpack.c.h.b16 %v477
  %v560 = vunpack.c.l.b16 %v478
  %v561 = vunpack.c.h.b16 %v478
  %v562 = vunpack.c.l.b16 %v479
  %v563 = vunpack.c.h.b16 %v479
  %v564 = vunpack.c.l.b16 %v480
  %v565 = vunpack.c.h.b16 %v480
  %v566 = vunpack.c.l.b16 %v481
  %v567 = vunpack.c.h.b16 %v481
  %v568 = vunpack.c.l.b16 %v482
  %v569 = vunpack.c.h.b16 %v482
  %v570 = vunpack.c.l.b16 %v483
  %v571 = vunpack.c.h.b16 %v483
  %v572 = vunpack.c.l.b16 %v484
  %v573 = vunpack.c.h.b16 %v484
  %v574 = vunpack.c.l.b16 %v485
  %v575 = vunpack.c.h.b16 %v485
  %v576 = vunpack.c.l.b16 %v486
  %v577 = vunpack.c.h.b16 %v486
  %v578 = vunpack.c.l.b16 %v487
  %v579 = vunpack.c.h.b16 %v487
  %v580 = vunpack.c.l.b16 %v488
  %v581 = vunpack.c.h.b16 %v488
  %v582 = vunpack.c.l.b16 %v489
  %v583 = vunpack.c.h.b16 %v489
  %v584 = vunpack.c.l.b16 %v490
  %v585 = vunpack.c.h.b16 %v490
  %v586 = vunpack.c.l.b16 %v491
  %v587 = vunpack.c.h.b16 %v491
  %v588 = vpack.c.b16 %v526, %v524
  %v589 = vpack.c.b16 %v527, %v525
  %v590 = vpack.c.b16 %v530, %v528
  %v591 = vpack.c.b16 %v531, %v529
  %v592 = vpack.c.b16 %v534, %v532
  %v593 = vpack.c.b16 %v535, %v533
  %v594 = vpack.c.b16 %v538, %v536
  %v595 = vpack.c.b16 %v539, %v537
  %v596 = vpack.c.b16 %v542, %v540
  %v597 = vpack.c.b16 %v543, %v541
  %v598 = vpack.c.b16 %v546, %v544
  %v599 = vpack.c.b16 %v547, %v545
  %v600 = vpack.c.b16 %v550, %v548
  %v601 = vpack.c.b16 %v551, %v549
  %v602 = vpack.c.b16 %v554, %v552
  %v603 = vpack.c.b16 %v555, %v553
  %v604 = vpack.c.b16 %v558, %v556
  %v605 = vpack.c.b16 %v559, %v557
  %v606 = vpack.c.b16 %v562, %v560
  %v607 = vpack.c.b16 %v563, %v561
  %v608 = vpack.c.b16 %v566, %v564
  %v609 = vpack.c.b16 %v567, %v565
  %v610 = vpack.c.b16 %v570, %v568
  %v611 = vpack.c.b16 %v571, %v569
  %v612 = vpack.c.b16 %v574, %v572
  %v613 = vpack.c.b16 %v575, %v573
  %v614 = vpack.c.b16 %v578, %v576
  %v615 = vpack.c.b16 %v579, %v577
  %v616 = vpack.c.b16 %v582, %v580
  %v617 = vpack.c.b16 %v583, %v581
  %v618 = vpack.c.b16 %v586, %v584
  %v619 = vpack.c.b16 %v587, %v585
  %652 = vmatprep.subr.bf16.mxu0 0
  %653 = vmatpush1.bf16.msra.mxu0 %v412
  %654 = vmatprep.subr.bf16.mxu0 0
  %655 = vmatpush1.bf16.msra.mxu0 %v413
  %656 = vmatprep.subr.bf16.mxu0 0
  %657 = vmatpush1.bf16.msra.mxu0 %v414
  %658 = vmatprep.subr.bf16.mxu0 0
  %659 = vmatpush1.bf16.msra.mxu0 %v415
  %660 = vmatprep.subr.bf16.mxu0 0
  %661 = vmatpush1.bf16.msra.mxu0 %v416
  %662 = vmatprep.subr.bf16.mxu0 0
  %663 = vmatpush1.bf16.msra.mxu0 %v417
  %664 = vmatprep.subr.bf16.mxu0 0
  %665 = vmatpush1.bf16.msra.mxu0 %v418
  %666 = vmatprep.subr.bf16.mxu0 0
  %667 = vmatpush1.bf16.msra.mxu0 %v419
  %668 = vmatprep.subr.bf16.mxu0 0
  %669 = vmatpush1.bf16.msra.mxu0 %v420
  %670 = vmatprep.subr.bf16.mxu0 0
  %671 = vmatpush1.bf16.msra.mxu0 %v421
  %672 = vmatprep.subr.bf16.mxu0 0
  %673 = vmatpush1.bf16.msra.mxu0 %v422
  %674 = vmatprep.subr.bf16.mxu0 0
  %675 = vmatpush1.bf16.msra.mxu0 %v423
  %676 = vmatprep.subr.bf16.mxu0 0
  %677 = vmatpush1.bf16.msra.mxu0 %v424
  %678 = vmatprep.subr.bf16.mxu0 0
  %679 = vmatpush1.bf16.msra.mxu0 %v425
  %680 = vmatprep.subr.bf16.mxu0 0
  %681 = vmatpush1.bf16.msra.mxu0 %v426
  %682 = vmatprep.subr.bf16.mxu0 0
  %683 = vmatpush1.bf16.msra.mxu0 %v427
  %684 = vmatprep.mubr.bf16.mxu0 %v589
  %685 = vmatmul.mubr.bf16.gmra.mrb[0].mxu0 %v588
  %v686 = vpop.f32.mrb[0].mxu0
  %v687 = vadd.f32 0.0, %v686
  %v688 = vpop.f32.mrb[0].mxu0
  %v689 = vpop.f32.mrb[0].mxu0
  %v690 = vadd.f32 0.0, %v689
  %v691 = vpop.f32.mrb[0].mxu0
  %692 = vmatprep.mubr.bf16.mxu0 %v591
  %693 = vmatmul.mubr.bf16.gmra.mrb[0].mxu0 %v590
  %v694 = vpop.f32.mrb[0].mxu0
  %v695 = vadd.f32 0.0, %v694
  %v696 = vpop.f32.mrb[0].mxu0
  %v697 = vpop.f32.mrb[0].mxu0
  %v698 = vadd.f32 0.0, %v697
  %v699 = vpop.f32.mrb[0].mxu0
  %700 = vmatprep.mubr.bf16.mxu0 %v593
  %701 = vmatmul.mubr.bf16.gmra.mrb[0].mxu0 %v592
  %v702 = vpop.f32.mrb[0].mxu0
  %v703 = vadd.f32 0.0, %v702
  %v704 = vpop.f32.mrb[0].mxu0
  %v705 = vpop.f32.mrb[0].mxu0
  %v706 = vadd.f32 0.0, %v705
  %v707 = vpop.f32.mrb[0].mxu0
  %708 = vmatprep.mubr.bf16.mxu0 %v595
  %709 = vmatmul.mubr.bf16.gmra.mrb[0].mxu0 %v594
  %v710 = vpop.f32.mrb[0].mxu0
  %v711 = vadd.f32 0.0, %v710
  %v712 = vpop.f32.mrb[0].mxu0
  %v713 = vpop.f32.mrb[0].mxu0
  %v714 = vadd.f32 0.0, %v713
  %v715 = vpop.f32.mrb[0].mxu0
  %716 = vmatprep.mubr.bf16.mxu0 %v597
  %717 = vmatmul.mubr.bf16.gmra.mrb[0].mxu0 %v596
  %v718 = vpop.f32.mrb[0].mxu0
  %v719 = vadd.f32 0.0, %v718
  %v720 = vpop.f32.mrb[0].mxu0
  %v721 = vpop.f32.mrb[0].mxu0
  %v722 = vadd.f32 0.0, %v721
  %v723 = vpop.f32.mrb[0].mxu0
  %724 = vmatprep.mubr.bf16.mxu0 %v599
  %725 = vmatmul.mubr.bf16.gmra.mrb[0].mxu0 %v598
  %v726 = vpop.f32.mrb[0].mxu0
  %v727 = vadd.f32 0.0, %v726
  %v728 = vpop.f32.mrb[0].mxu0
  %v729 = vpop.f32.mrb[0].mxu0
  %v730 = vadd.f32 0.0, %v729
  %v731 = vpop.f32.mrb[0].mxu0
  %732 = vmatprep.mubr.bf16.mxu0 %v601
  %733 = vmatmul.mubr.bf16.gmra.mrb[0].mxu0 %v600
  %v734 = vpop.f32.mrb[0].mxu0
  %v735 = vadd.f32 0.0, %v734
  %v736 = vpop.f32.mrb[0].mxu0
  %v737 = vpop.f32.mrb[0].mxu0
  %v738 = vadd.f32 0.0, %v737
  %v739 = vpop.f32.mrb[0].mxu0
  %740 = vmatprep.mubr.bf16.mxu0 %v603
  %741 = vmatmul.mubr.bf16.gmra.mrb[0].mxu0 %v602
  %v742 = vpop.f32.mrb[0].mxu0
  %v743 = vadd.f32 0.0, %v742
  %v744 = vpop.f32.mrb[0].mxu0
  %v745 = vpop.f32.mrb[0].mxu0
  %v746 = vadd.f32 0.0, %v745
  %v747 = vpop.f32.mrb[0].mxu0
  %748 = vmatprep.mubr.bf16.mxu0 %v605
  %749 = vmatmul.mubr.bf16.gmra.mrb[0].mxu0 %v604
  %v750 = vpop.f32.mrb[0].mxu0
  %v751 = vadd.f32 0.0, %v750
  %v752 = vpop.f32.mrb[0].mxu0
  %v753 = vpop.f32.mrb[0].mxu0
  %v754 = vadd.f32 0.0, %v753
  %v755 = vpop.f32.mrb[0].mxu0
  %756 = vmatprep.mubr.bf16.mxu0 %v607
  %757 = vmatmul.mubr.bf16.gmra.mrb[0].mxu0 %v606
  %v758 = vpop.f32.mrb[0].mxu0
  %v759 = vadd.f32 0.0, %v758
  %v760 = vpop.f32.mrb[0].mxu0
  %v761 = vpop.f32.mrb[0].mxu0
  %v762 = vadd.f32 0.0, %v761
  %v763 = vpop.f32.mrb[0].mxu0
  %764 = vmatprep.mubr.bf16.mxu0 %v609
  %765 = vmatmul.mubr.bf16.gmra.mrb[0].mxu0 %v608
  %v766 = vpop.f32.mrb[0].mxu0
  %v767 = vadd.f32 0.0, %v766
  %v768 = vpop.f32.mrb[0].mxu0
  %v769 = vpop.f32.mrb[0].mxu0
  %v770 = vadd.f32 0.0, %v769
  %v771 = vpop.f32.mrb[0].mxu0
  %772 = vmatprep.mubr.bf16.mxu0 %v611
  %773 = vmatmul.mubr.bf16.gmra.mrb[0].mxu0 %v610
  %v774 = vpop.f32.mrb[0].mxu0
  %v775 = vadd.f32 0.0, %v774
  %v776 = vpop.f32.mrb[0].mxu0
  %v777 = vpop.f32.mrb[0].mxu0
  %v778 = vadd.f32 0.0, %v777
  %v779 = vpop.f32.mrb[0].mxu0
  %780 = vmatprep.mubr.bf16.mxu0 %v613
  %781 = vmatmul.mubr.bf16.gmra.mrb[0].mxu0 %v612
  %v782 = vpop.f32.mrb[0].mxu0
  %v783 = vadd.f32 0.0, %v782
  %v784 = vpop.f32.mrb[0].mxu0
  %v785 = vpop.f32.mrb[0].mxu0
  %v786 = vadd.f32 0.0, %v785
  %v787 = vpop.f32.mrb[0].mxu0
  %788 = vmatprep.mubr.bf16.mxu0 %v615
  %789 = vmatmul.mubr.bf16.gmra.mrb[0].mxu0 %v614
  %v790 = vpop.f32.mrb[0].mxu0
  %v791 = vadd.f32 0.0, %v790
  %v792 = vpop.f32.mrb[0].mxu0
  %v793 = vpop.f32.mrb[0].mxu0
  %v794 = vadd.f32 0.0, %v793
  %v795 = vpop.f32.mrb[0].mxu0
  %796 = vmatprep.mubr.bf16.mxu0 %v617
  %797 = vmatmul.mubr.bf16.gmra.mrb[0].mxu0 %v616
  %v798 = vpop.f32.mrb[0].mxu0
  %v799 = vadd.f32 0.0, %v798
  %v800 = vpop.f32.mrb[0].mxu0
  %v801 = vpop.f32.mrb[0].mxu0
  %v802 = vadd.f32 0.0, %v801
  %v803 = vpop.f32.mrb[0].mxu0
  %804 = vmatprep.mubr.bf16.mxu0 %v619
  %805 = vmatmul.mubr.bf16.gmra.mrb[0].mxu0 %v618
  %v806 = vpop.f32.mrb[0].mxu0
  %v807 = vadd.f32 0.0, %v806
  %v808 = vpop.f32.mrb[0].mxu0
  %v809 = vpop.f32.mrb[0].mxu0
  %v810 = vadd.f32 0.0, %v809
  %v811 = vpop.f32.mrb[0].mxu0
  %812 = vdwg.mxu0
  %v813 = vadd.f32 %v428, %v687
  %v814 = vadd.f32 %v429, %v690
  %v815 = vadd.f32 %v430, %v695
  %v816 = vadd.f32 %v431, %v698
  %v817 = vadd.f32 %v432, %v703
  %v818 = vadd.f32 %v433, %v706
  %v819 = vadd.f32 %v434, %v711
  %v820 = vadd.f32 %v435, %v714
  %v821 = vadd.f32 %v436, %v719
  %v822 = vadd.f32 %v437, %v722
  %v823 = vadd.f32 %v438, %v727
  %v824 = vadd.f32 %v439, %v730
  %v825 = vadd.f32 %v440, %v735
  %v826 = vadd.f32 %v441, %v738
  %v827 = vadd.f32 %v442, %v743
  %v828 = vadd.f32 %v443, %v746
  %v829 = vadd.f32 %v444, %v751
  %v830 = vadd.f32 %v445, %v754
  %v831 = vadd.f32 %v446, %v759
  %v832 = vadd.f32 %v447, %v762
  %v833 = vadd.f32 %v448, %v767
  %v834 = vadd.f32 %v449, %v770
  %v835 = vadd.f32 %v450, %v775
  %v836 = vadd.f32 %v451, %v778
  %v837 = vadd.f32 %v452, %v783
  %v838 = vadd.f32 %v453, %v786
  %v839 = vadd.f32 %v454, %v791
  %v840 = vadd.f32 %v455, %v794
  %v841 = vadd.f32 %v456, %v799
  %v842 = vadd.f32 %v457, %v802
  %v843 = vadd.f32 %v458, %v807
  %v844 = vadd.f32 %v459, %v810
  %845 = vst [vmem:[#allocation2] sm:$0xff] %v813
  %846 = vst [vmem:[#allocation2 + $0x8] sm:$0xff] %v814
  %847 = vst [vmem:[#allocation2 + $0x10] sm:$0xff] %v815
  %848 = vst [vmem:[#allocation2 + $0x18] sm:$0xff] %v816
  %849 = vst [vmem:[#allocation2 + $0x20] sm:$0xff] %v817
  %850 = vst [vmem:[#allocation2 + $0x28] sm:$0xff] %v818
  %851 = vst [vmem:[#allocation2 + $0x30] sm:$0xff] %v819
  %852 = vst [vmem:[#allocation2 + $0x38] sm:$0xff] %v820
  %853 = vst [vmem:[#allocation2 + $0x40] sm:$0xff] %v821
  %854 = vst [vmem:[#allocation2 + $0x48] sm:$0xff] %v822
  %855 = vst [vmem:[#allocation2 + $0x50] sm:$0xff] %v823
  %856 = vst [vmem:[#allocation2 + $0x58] sm:$0xff] %v824
  %857 = vst [vmem:[#allocation2 + $0x60] sm:$0xff] %v825
  %858 = vst [vmem:[#allocation2 + $0x68] sm:$0xff] %v826
  %859 = vst [vmem:[#allocation2 + $0x70] sm:$0xff] %v827
  %860 = vst [vmem:[#allocation2 + $0x78] sm:$0xff] %v828
  %861 = vst [vmem:[#allocation2 + $0x80] sm:$0xff] %v829
  %862 = vst [vmem:[#allocation2 + $0x88] sm:$0xff] %v830
  %863 = vst [vmem:[#allocation2 + $0x90] sm:$0xff] %v831
  %864 = vst [vmem:[#allocation2 + $0x98] sm:$0xff] %v832
  %865 = vst [vmem:[#allocation2 + $0xa0] sm:$0xff] %v833
  %866 = vst [vmem:[#allocation2 + $0xa8] sm:$0xff] %v834
  %867 = vst [vmem:[#allocation2 + $0xb0] sm:$0xff] %v835
  %868 = vst [vmem:[#allocation2 + $0xb8] sm:$0xff] %v836
  %869 = vst [vmem:[#allocation2 + $0xc0] sm:$0xff] %v837
  %870 = vst [vmem:[#allocation2 + $0xc8] sm:$0xff] %v838
  %871 = vst [vmem:[#allocation2 + $0xd0] sm:$0xff] %v839
  %872 = vst [vmem:[#allocation2 + $0xd8] sm:$0xff] %v840
  %873 = vst [vmem:[#allocation2 + $0xe0] sm:$0xff] %v841
  %874 = vst [vmem:[#allocation2 + $0xe8] sm:$0xff] %v842
  %875 = vst [vmem:[#allocation2 + $0xf0] sm:$0xff] %v843
  %876 = vst [vmem:[#allocation2 + $0xf8] sm:$0xff] %v844
  // Predicated region
  $region22: #{gcn_forward.4} parent=0 // pred_check
    %p877 = pneg %p18
  $region23: #{gcn_forward.4} parent=0 // pred_check_branch
    %879 = sbr.rel (%p877) target = $region25
  $region24: #{gcn_forward.4} parent=0 // pred_region
    %v880 = vld [vmem:[#allocation2] sm:$0xff]
    %v881 = vld [vmem:[#allocation2 + $0x8] sm:$0xff]
    %v882 = vld [vmem:[#allocation2 + $0x10] sm:$0xff]
    %v883 = vld [vmem:[#allocation2 + $0x18] sm:$0xff]
    %v884 = vld [vmem:[#allocation2 + $0x20] sm:$0xff]
    %v885 = vld [vmem:[#allocation2 + $0x28] sm:$0xff]
    %v886 = vld [vmem:[#allocation2 + $0x30] sm:$0xff]
    %v887 = vld [vmem:[#allocation2 + $0x38] sm:$0xff]
    %v888 = vld [vmem:[#allocation2 + $0x40] sm:$0xff]
    %v889 = vld [vmem:[#allocation2 + $0x48] sm:$0xff]
    %v890 = vld [vmem:[#allocation2 + $0x50] sm:$0xff]
    %v891 = vld [vmem:[#allocation2 + $0x58] sm:$0xff]
    %v892 = vld [vmem:[#allocation2 + $0x60] sm:$0xff]
    %v893 = vld [vmem:[#allocation2 + $0x68] sm:$0xff]
    %v894 = vld [vmem:[#allocation2 + $0x70] sm:$0xff]
    %v895 = vld [vmem:[#allocation2 + $0x78] sm:$0xff]
    %v896 = vld [vmem:[#allocation2 + $0x80] sm:$0xff]
    %v897 = vld [vmem:[#allocation2 + $0x88] sm:$0xff]
    %v898 = vld [vmem:[#allocation2 + $0x90] sm:$0xff]
    %v899 = vld [vmem:[#allocation2 + $0x98] sm:$0xff]
    %v900 = vld [vmem:[#allocation2 + $0xa0] sm:$0xff]
    %v901 = vld [vmem:[#allocation2 + $0xa8] sm:$0xff]
    %v902 = vld [vmem:[#allocation2 + $0xb0] sm:$0xff]
    %v903 = vld [vmem:[#allocation2 + $0xb8] sm:$0xff]
    %v904 = vld [vmem:[#allocation2 + $0xc0] sm:$0xff]
    %v905 = vld [vmem:[#allocation2 + $0xc8] sm:$0xff]
    %v906 = vld [vmem:[#allocation2 + $0xd0] sm:$0xff]
    %v907 = vld [vmem:[#allocation2 + $0xd8] sm:$0xff]
    %v908 = vld [vmem:[#allocation2 + $0xe0] sm:$0xff]
    %v909 = vld [vmem:[#allocation2 + $0xe8] sm:$0xff]
    %v910 = vld [vmem:[#allocation2 + $0xf0] sm:$0xff]
    %v911 = vld [vmem:[#allocation2 + $0xf8] sm:$0xff]
    %v912 = vld [vmem:[%s3] sm:$0xff]
    %v913 = vld [vmem:[%s3 + $0x8] sm:$0xff]
    %v914 = vld [vmem:[%s3 + $0x10] sm:$0xff]
    %v915 = vld [vmem:[%s3 + $0x18] sm:$0xff]
    %v916 = vld [vmem:[%s3 + $0x20] sm:$0xff]
    %v917 = vld [vmem:[%s3 + $0x28] sm:$0xff]
    %v918 = vld [vmem:[%s3 + $0x30] sm:$0xff]
    %v919 = vld [vmem:[%s3 + $0x38] sm:$0xff]
    %v920 = vld [vmem:[%s3 + $0x40] sm:$0xff]
    %v921 = vld [vmem:[%s3 + $0x48] sm:$0xff]
    %v922 = vld [vmem:[%s3 + $0x50] sm:$0xff]
    %v923 = vld [vmem:[%s3 + $0x58] sm:$0xff]
    %v924 = vld [vmem:[%s3 + $0x60] sm:$0xff]
    %v925 = vld [vmem:[%s3 + $0x68] sm:$0xff]
    %v926 = vld [vmem:[%s3 + $0x70] sm:$0xff]
    %v927 = vld [vmem:[%s3 + $0x78] sm:$0xff]
    %v928 = vld [vmem:[%s3 + $0x80] sm:$0xff]
    %v929 = vld [vmem:[%s3 + $0x88] sm:$0xff]
    %v930 = vld [vmem:[%s3 + $0x90] sm:$0xff]
    %v931 = vld [vmem:[%s3 + $0x98] sm:$0xff]
    %v932 = vld [vmem:[%s3 + $0xa0] sm:$0xff]
    %v933 = vld [vmem:[%s3 + $0xa8] sm:$0xff]
    %v934 = vld [vmem:[%s3 + $0xb0] sm:$0xff]
    %v935 = vld [vmem:[%s3 + $0xb8] sm:$0xff]
    %v936 = vld [vmem:[%s3 + $0xc0] sm:$0xff]
    %v937 = vld [vmem:[%s3 + $0xc8] sm:$0xff]
    %v938 = vld [vmem:[%s3 + $0xd0] sm:$0xff]
    %v939 = vld [vmem:[%s3 + $0xd8] sm:$0xff]
    %v940 = vld [vmem:[%s3 + $0xe0] sm:$0xff]
    %v941 = vld [vmem:[%s3 + $0xe8] sm:$0xff]
    %v942 = vld [vmem:[%s3 + $0xf0] sm:$0xff]
    %v943 = vld [vmem:[%s3 + $0xf8] sm:$0xff]
    %v944 = vadd.f32 %v880, %v912
    %v945 = vadd.f32 %v881, %v913
    %v946 = vadd.f32 %v882, %v914
    %v947 = vadd.f32 %v883, %v915
    %v948 = vadd.f32 %v884, %v916
    %v949 = vadd.f32 %v885, %v917
    %v950 = vadd.f32 %v886, %v918
    %v951 = vadd.f32 %v887, %v919
    %v952 = vadd.f32 %v888, %v920
    %v953 = vadd.f32 %v889, %v921
    %v954 = vadd.f32 %v890, %v922
    %v955 = vadd.f32 %v891, %v923
    %v956 = vadd.f32 %v892, %v924
    %v957 = vadd.f32 %v893, %v925
    %v958 = vadd.f32 %v894, %v926
    %v959 = vadd.f32 %v895, %v927
    %v960 = vadd.f32 %v896, %v928
    %v961 = vadd.f32 %v897, %v929
    %v962 = vadd.f32 %v898, %v930
    %v963 = vadd.f32 %v899, %v931
    %v964 = vadd.f32 %v900, %v932
    %v965 = vadd.f32 %v901, %v933
    %v966 = vadd.f32 %v902, %v934
    %v967 = vadd.f32 %v903, %v935
    %v968 = vadd.f32 %v904, %v936
    %v969 = vadd.f32 %v905, %v937
    %v970 = vadd.f32 %v906, %v938
    %v971 = vadd.f32 %v907, %v939
    %v972 = vadd.f32 %v908, %v940
    %v973 = vadd.f32 %v909, %v941
    %v974 = vadd.f32 %v910, %v942
    %v975 = vadd.f32 %v911, %v943
    %v976 = vmax.f32 %v944, 0.0
    %v977 = vmax.f32 %v945, 0.0
    %v978 = vmax.f32 %v946, 0.0
    %v979 = vmax.f32 %v947, 0.0
    %v980 = vmax.f32 %v948, 0.0
    %v981 = vmax.f32 %v949, 0.0
    %v982 = vmax.f32 %v950, 0.0
    %v983 = vmax.f32 %v951, 0.0
    %v984 = vmax.f32 %v952, 0.0
    %v985 = vmax.f32 %v953, 0.0
    %v986 = vmax.f32 %v954, 0.0
    %v987 = vmax.f32 %v955, 0.0
    %v988 = vmax.f32 %v956, 0.0
    %v989 = vmax.f32 %v957, 0.0
    %v990 = vmax.f32 %v958, 0.0
    %v991 = vmax.f32 %v959, 0.0
    %v992 = vmax.f32 %v960, 0.0
    %v993 = vmax.f32 %v961, 0.0
    %v994 = vmax.f32 %v962, 0.0
    %v995 = vmax.f32 %v963, 0.0
    %v996 = vmax.f32 %v964, 0.0
    %v997 = vmax.f32 %v965, 0.0
    %v998 = vmax.f32 %v966, 0.0
    %v999 = vmax.f32 %v967, 0.0
    %v1000 = vmax.f32 %v968, 0.0
    %v1001 = vmax.f32 %v969, 0.0
    %v1002 = vmax.f32 %v970, 0.0
    %v1003 = vmax.f32 %v971, 0.0
    %v1004 = vmax.f32 %v972, 0.0
    %v1005 = vmax.f32 %v973, 0.0
    %v1006 = vmax.f32 %v974, 0.0
    %v1007 = vmax.f32 %v975, 0.0
    %v1008 = vpack.c.bf16 %v977, %v976
    %v1009 = vpack.c.bf16 %v979, %v978
    %v1010 = vpack.c.bf16 %v981, %v980
    %v1011 = vpack.c.bf16 %v983, %v982
    %v1012 = vpack.c.bf16 %v985, %v984
    %v1013 = vpack.c.bf16 %v987, %v986
    %v1014 = vpack.c.bf16 %v989, %v988
    %v1015 = vpack.c.bf16 %v991, %v990
    %v1016 = vpack.c.bf16 %v993, %v992
    %v1017 = vpack.c.bf16 %v995, %v994
    %v1018 = vpack.c.bf16 %v997, %v996
    %v1019 = vpack.c.bf16 %v999, %v998
    %v1020 = vpack.c.bf16 %v1001, %v1000
    %v1021 = vpack.c.bf16 %v1003, %v1002
    %v1022 = vpack.c.bf16 %v1005, %v1004
    %v1023 = vpack.c.bf16 %v1007, %v1006
    %v1040 = vunpack.c.l.b16 %v1008
    %v1041 = vunpack.c.h.b16 %v1008
    %v1042 = vunpack.c.l.b16 %v1009
    %v1043 = vunpack.c.h.b16 %v1009
    %v1044 = vunpack.c.l.b16 %v1010
    %v1045 = vunpack.c.h.b16 %v1010
    %v1046 = vunpack.c.l.b16 %v1011
    %v1047 = vunpack.c.h.b16 %v1011
    %v1048 = vunpack.c.l.b16 %v1012
    %v1049 = vunpack.c.h.b16 %v1012
    %v1050 = vunpack.c.l.b16 %v1013
    %v1051 = vunpack.c.h.b16 %v1013
    %v1052 = vunpack.c.l.b16 %v1014
    %v1053 = vunpack.c.h.b16 %v1014
    %v1054 = vunpack.c.l.b16 %v1015
    %v1055 = vunpack.c.h.b16 %v1015
    %v1056 = vunpack.c.l.b16 %v1016
    %v1057 = vunpack.c.h.b16 %v1016
    %v1058 = vunpack.c.l.b16 %v1017
    %v1059 = vunpack.c.h.b16 %v1017
    %v1060 = vunpack.c.l.b16 %v1018
    %v1061 = vunpack.c.h.b16 %v1018
    %v1062 = vunpack.c.l.b16 %v1019
    %v1063 = vunpack.c.h.b16 %v1019
    %v1064 = vunpack.c.l.b16 %v1020
    %v1065 = vunpack.c.h.b16 %v1020
    %v1066 = vunpack.c.l.b16 %v1021
    %v1067 = vunpack.c.h.b16 %v1021
    %v1068 = vunpack.c.l.b16 %v1022
    %v1069 = vunpack.c.h.b16 %v1022
    %v1070 = vunpack.c.l.b16 %v1023
    %v1071 = vunpack.c.h.b16 %v1023
    %v1072 = vpack.c.b16 %v1040, %v1040
    %v1073 = vpack.c.b16 %v1041, %v1041
    %v1074 = vpack.c.b16 %v1042, %v1042
    %v1075 = vpack.c.b16 %v1043, %v1043
    %v1076 = vpack.c.b16 %v1044, %v1044
    %v1077 = vpack.c.b16 %v1045, %v1045
    %v1078 = vpack.c.b16 %v1046, %v1046
    %v1079 = vpack.c.b16 %v1047, %v1047
    %v1080 = vpack.c.b16 %v1048, %v1048
    %v1081 = vpack.c.b16 %v1049, %v1049
    %v1082 = vpack.c.b16 %v1050, %v1050
    %v1083 = vpack.c.b16 %v1051, %v1051
    %v1084 = vpack.c.b16 %v1052, %v1052
    %v1085 = vpack.c.b16 %v1053, %v1053
    %v1086 = vpack.c.b16 %v1054, %v1054
    %v1087 = vpack.c.b16 %v1055, %v1055
    %v1088 = vpack.c.b16 %v1056, %v1056
    %v1089 = vpack.c.b16 %v1057, %v1057
    %v1090 = vpack.c.b16 %v1058, %v1058
    %v1091 = vpack.c.b16 %v1059, %v1059
    %v1092 = vpack.c.b16 %v1060, %v1060
    %v1093 = vpack.c.b16 %v1061, %v1061
    %v1094 = vpack.c.b16 %v1062, %v1062
    %v1095 = vpack.c.b16 %v1063, %v1063
    %v1096 = vpack.c.b16 %v1064, %v1064
    %v1097 = vpack.c.b16 %v1065, %v1065
    %v1098 = vpack.c.b16 %v1066, %v1066
    %v1099 = vpack.c.b16 %v1067, %v1067
    %v1100 = vpack.c.b16 %v1068, %v1068
    %v1101 = vpack.c.b16 %v1069, %v1069
    %v1102 = vpack.c.b16 %v1070, %v1070
    %v1103 = vpack.c.b16 %v1071, %v1071
    %1136 = vst [vmem:[%s4] sm:$0xf] %v1072
    %1137 = vst [vmem:[%s4 + $0x4] sm:$0xf] %v1073
    %1138 = vst [vmem:[%s4 + $0x8] sm:$0xf] %v1074
    %1139 = vst [vmem:[%s4 + $0xc] sm:$0xf] %v1075
    %1140 = vst [vmem:[%s4 + $0x10] sm:$0xf] %v1076
    %1141 = vst [vmem:[%s4 + $0x14] sm:$0xf] %v1077
    %1142 = vst [vmem:[%s4 + $0x18] sm:$0xf] %v1078
    %1143 = vst [vmem:[%s4 + $0x1c] sm:$0xf] %v1079
    %1144 = vst [vmem:[%s4 + $0x20] sm:$0xf] %v1080
    %1145 = vst [vmem:[%s4 + $0x24] sm:$0xf] %v1081
    %1146 = vst [vmem:[%s4 + $0x28] sm:$0xf] %v1082
    %1147 = vst [vmem:[%s4 + $0x2c] sm:$0xf] %v1083
    %1148 = vst [vmem:[%s4 + $0x30] sm:$0xf] %v1084
    %1149 = vst [vmem:[%s4 + $0x34] sm:$0xf] %v1085
    %1150 = vst [vmem:[%s4 + $0x38] sm:$0xf] %v1086
    %1151 = vst [vmem:[%s4 + $0x3c] sm:$0xf] %v1087
    %1152 = vst [vmem:[%s4 + $0x40] sm:$0xf] %v1088
    %1153 = vst [vmem:[%s4 + $0x44] sm:$0xf] %v1089
    %1154 = vst [vmem:[%s4 + $0x48] sm:$0xf] %v1090
    %1155 = vst [vmem:[%s4 + $0x4c] sm:$0xf] %v1091
    %1156 = vst [vmem:[%s4 + $0x50] sm:$0xf] %v1092
    %1157 = vst [vmem:[%s4 + $0x54] sm:$0xf] %v1093
    %1158 = vst [vmem:[%s4 + $0x58] sm:$0xf] %v1094
    %1159 = vst [vmem:[%s4 + $0x5c] sm:$0xf] %v1095
    %1160 = vst [vmem:[%s4 + $0x60] sm:$0xf] %v1096
    %1161 = vst [vmem:[%s4 + $0x64] sm:$0xf] %v1097
    %1162 = vst [vmem:[%s4 + $0x68] sm:$0xf] %v1098
    %1163 = vst [vmem:[%s4 + $0x6c] sm:$0xf] %v1099
    %1164 = vst [vmem:[%s4 + $0x70] sm:$0xf] %v1100
    %1165 = vst [vmem:[%s4 + $0x74] sm:$0xf] %v1101
    %1166 = vst [vmem:[%s4 + $0x78] sm:$0xf] %v1102
    %1167 = vst [vmem:[%s4 + $0x7c] sm:$0xf] %v1103
  $region25: #{gcn_forward.4} parent=0 // pred_fallthru
    _
  // Predicated region
  $region26: #{gcn_forward.4} parent=0 // pred_check
    _
  $region27: #{gcn_forward.4} parent=0 // pred_check_branch
    %1169 = sbr.rel (0) target = $region29
  $region28: #{gcn_forward.4} parent=0 // pred_region
    _
  $region29: #{gcn_forward.4} parent=0 // pred_fallthru
    _
  // Predicated region
  $region30: #{gcn_forward.4} parent=0 // pred_check
    _
  $region31: #{gcn_forward.4} parent=0 // pred_check_branch
    %1171 = sbr.rel (0) target = $region33
  $region32: #{gcn_forward.4} parent=0 // pred_region
    _
  $region33: #{gcn_forward.4} parent=0 // pred_fallthru
    _

</llo_original>
